<compile_context>
chip_gen: v7x
topology: tpu7x:2x2x1
jax: 0.10.0
libtpu: 0.0.40
codegen_flags: <defaults>
</compile_context>

<pallas_src>
import jax
import jax.numpy as jnp
from jax import lax
from jax.experimental import pallas as pl
from jax.experimental.pallas import tpu as pltpu


def _round_up(v, m):
    return ((v + m - 1) // m) * m


def _tpu_topology():
    """Returns (lane_multiple, tensorcores_per_chip, vmem_capacity_bytes)."""
    kind = ""
    try:
        kind = jax.devices()[0].device_kind.lower()
    except Exception:
        pass
    old_gen = any(g in kind for g in ("v2", "v3", "v4", "v5"))
    lane = 128 if old_gen else 256          # v6e/v7x MXU tiles are 256 wide
    num_tc = 2 if "v7" in kind else 1       # megacore batch split only on v7x
    vmem = (64 if "v7" in kind else 128) * 1024 * 1024
    try:                                    # best effort; fall back to table
        cap = getattr(pltpu.get_tpu_info(), "vmem_capacity_bytes", None)
        if cap:
            vmem = int(cap)
    except Exception:
        pass
    return lane, num_tc, vmem


def _make_cornn_kernel(dt, gamma, epsilon, tt, t_total, unroll):
    # Folded scalar constants (fewer VPU ops on the serial critical path).
    a = 1.0 - dt * epsilon
    b = dt * gamma
    c = dt
    needs_mask = (t_total % tt) != 0    # padded steps exist in the last chunk

    def kernel(inp_ref, whz_ref, why_ref, out_ref, hz_ref, hy_ref):
        t_chunk = pl.program_id(1)

        @pl.when(t_chunk == 0)
        def _():
            hz_ref[...] = jnp.zeros_like(hz_ref)
            hy_ref[...] = jnp.zeros_like(hy_ref)

        # Hoist weight loads out of the (partially unrolled) serial loop.
        w_hz = whz_ref[...]
        w_hy = why_ref[...]
        chunk_base = t_chunk * tt

        def step(i, carry):
            hz, hy = carry
            # Two MXU matmuls on the state halves (same total K as a fused
            # (B,2H)x(2H,H) matmul, but no per-step concat copy).
            pre = (jnp.dot(hz.astype(w_hz.dtype), w_hz,
                           preferred_element_type=jnp.float32)
                   + jnp.dot(hy.astype(w_hy.dtype), w_hy,
                             preferred_element_type=jnp.float32)
                   + inp_ref[i].astype(jnp.float32))
            hz_new = a * hz - b * hy + c * jnp.tanh(pre)
            hy_new = hy + dt * hz_new
            if needs_mask:
                # Masked remainder: padded timesteps must NOT advance state.
                m = ((chunk_base + i) < t_total).astype(jnp.float32)
                hz_new = hz + m * (hz_new - hz)
                hy_new = hy + m * (hy_new - hy)
            return hz_new, hy_new

        hz, hy = lax.fori_loop(0, tt, step, (hz_ref[...], hy_ref[...]),
                               unroll=unroll)
        hz_ref[...] = hz
        hy_ref[...] = hy

        @pl.when(t_chunk == pl.num_programs(1) - 1)
        def _():
            out_ref[...] = hy.astype(out_ref.dtype)

    return kernel


def _weight_spec(hp, single_buffer):
    """BlockSpec for one (Hp, Hp) weight half (constant index_map)."""
    if single_buffer:
        try:
            # Constant index_map => DMA'd once; single-buffering halves VMEM.
            return pl.BlockSpec((hp, hp), lambda bb, tt: (0, 0),
                                pipeline_mode=pl.Buffered(1))
        except Exception:
            pass   # older pallas versions: fall back to default buffering
    return pl.BlockSpec((hp, hp), lambda bb, tt: (0, 0))


def cornn_forward(x, wi, bi, wh, *, dt, gamma, epsilon,
                  time_chunk=None, mxu_dtype=jnp.bfloat16, input_dtype=None):
    """x: (T, B, n_inp); wi: (n_hid, n_inp); bi: (n_hid,); wh: (n_hid, 2*n_hid).

    Returns hy: (B, n_hid) float32 (the final hidden state, as in the module).
    mxu_dtype controls the h2h weight dtype on the MXU (state and accumulation
    stay f32); input_dtype=None auto-selects f32 vs bf16 input streaming based
    on the chip's VMEM budget.
    """
    T, B, n_inp = x.shape
    n_hid = wi.shape[0]

    if T == 0:
        # Guard: the module would return the zero-initialized hy.
        return jnp.zeros((B, n_hid), jnp.float32)

    # --- Hoist the i2h projection out of the recurrence (one big matmul). ---
    inputs = (jnp.einsum('tbi,hi->tbh',
                         x.astype(jnp.float32), wi.astype(jnp.float32),
                         preferred_element_type=jnp.float32)
              + bi.astype(jnp.float32))                       # (T, B, n_hid)

    lane_mult, num_tc, vmem_bytes = _tpu_topology()

    # --- Pad to hardware tiles: B -> x8 sublanes, n_hid -> MXU-wide lanes. --
    Bp = _round_up(B, 8)
    Hp = _round_up(n_hid, lane_mult)

    # --- Batch split only where it buys real parallelism (v7x megacore) and
    #     each per-core tile stays MXU-meaningful. On v5e/v6e (1 TC) splitting
    #     only doubles the number of serial grid steps.
    nb = 2 if (num_tc >= 2 and Bp % 16 == 0 and Bp // 2 >= 32) else 1
    TB = Bp // nb

    # --- h2h weights: pre-transposed halves, (Hp, Hp) each. -----------------
    # cat order in the reference is (hz, hy): columns [:n_hid] of wh act on hz.
    ph = Hp - n_hid
    whz_t = jnp.pad(wh[:, :n_hid].T, ((0, ph), (0, ph))).astype(mxu_dtype)
    why_t = jnp.pad(wh[:, n_hid:].T, ((0, ph), (0, ph))).astype(mxu_dtype)

    w_itemsize = jnp.dtype(mxu_dtype).itemsize
    # Single-buffer weights only when double-buffering them would be heavy.
    single_buffer_w = (2 * 2 * Hp * Hp * w_itemsize) > (8 << 20)
    w_bufs = 1 if single_buffer_w else 2

    # --- VMEM budget -> input dtype, time chunk TT, vmem_limit_bytes. -------
    fixed = w_bufs * 2 * Hp * Hp * w_itemsize     # two weight halves
    fixed += 2 * TB * Hp * 4                      # double-buffered output
    fixed += 2 * TB * Hp * 4                      # hz + hy state scratch
    budget = int(0.7 * vmem_bytes)

    if input_dtype is None:
        # Stream inputs in bf16 only when f32 streaming would force a short
        # time chunk within the chip's VMEM budget (mainly v7x, 64 MiB).
        want_tt = min(T, 32)
        input_dtype = (jnp.bfloat16
                       if (budget - fixed) < want_tt * (2 * TB * Hp * 4)
                       else jnp.float32)
    in_itemsize = jnp.dtype(input_dtype).itemsize
    per_step = 2 * TB * Hp * in_itemsize          # double-buffered inputs/step

    if time_chunk is None:
        avail = max(budget - fixed, per_step)
        TT = int(max(1, min(T, 32, avail // per_step)))
    else:
        TT = int(max(1, min(int(time_chunk), T)))
    nt = -(-T // TT)
    T_pad = nt * TT
    unroll = int(max(1, min(TT, 8)))              # partial unroll only

    vmem_need = fixed + TT * per_step
    vmem_limit = int(min(vmem_bytes,
                         max(vmem_need + vmem_need // 4 + (2 << 20), 16 << 20)))

    # Pad; padded timesteps are MASKED in the kernel (zero inputs alone would
    # still advance the oscillator state, so padding is not sufficient).
    inputs = jnp.pad(inputs, ((0, T_pad - T), (0, Bp - B), (0, Hp - n_hid)))
    inputs = inputs.astype(input_dtype)

    kernel = _make_cornn_kernel(float(dt), float(gamma), float(epsilon),
                                TT, T, unroll)

    out = pl.pallas_call(
        kernel,
        out_shape=jax.ShapeDtypeStruct((Bp, Hp), jnp.float32),
        grid_spec=pltpu.PrefetchScalarGridSpec(
            num_scalar_prefetch=0,
            grid=(nb, nt),
            in_specs=[
                pl.BlockSpec((TT, TB, Hp), lambda bb, tt: (tt, bb, 0)),  # inputs
                _weight_spec(Hp, single_buffer_w),                       # Whz^T
                _weight_spec(Hp, single_buffer_w),                       # Why^T
            ],
            out_specs=pl.BlockSpec((TB, Hp), lambda bb, tt: (bb, 0)),
            scratch_shapes=[
                pltpu.VMEM((TB, Hp), jnp.float32),   # hz state
                pltpu.VMEM((TB, Hp), jnp.float32),   # hy state
            ],
        ),
        compiler_params=pltpu.CompilerParams(
            dimension_semantics=("parallel", "arbitrary"),
            vmem_limit_bytes=vmem_limit),
    )(inputs, whz_t, why_t)

    return out[:B, :n_hid]


def cornn_reference(x, wi, bi, wh, *, dt, gamma, epsilon):
    """Pure-JAX reference mirroring the PyTorch forward exactly."""
    T, B, n_inp = x.shape
    n_hid = wi.shape[0]
    inputs = jnp.einsum('tbi,hi->tbh', x, wi) + bi            # i2h(x)
    hy = jnp.zeros((B, n_hid), jnp.float32)
    hz = jnp.zeros((B, n_hid), jnp.float32)
    for t in range(T):
        cat = jnp.concatenate((hz, hy), axis=1)
        hz = hz + dt * (jnp.tanh(cat @ wh.T + inputs[t])
                        - gamma * hy - epsilon * hz)
        hy = hy + dt * hz
    return hy


if __name__ == "__main__":
    # Small shapes consistent with the module: seq=8, batch=2, n_inp=16, n_hid=32
    T, B, n_inp, n_hid = 8, 2, 16, 32
    dt, gamma, epsilon = 0.042, 2.7, 4.7

    key = jax.random.PRNGKey(0)
    kx, kwi, kbi, kwh = jax.random.split(key, 4)

    x = jax.random.normal(kx, (T, B, n_inp), dtype=jnp.float32)

    # Deterministic parameter init (PyTorch-Linear-style uniform bounds).
    bound_i = 1.0 / jnp.sqrt(n_inp)
    bound_h = 1.0 / jnp.sqrt(2 * n_hid)
    wi = jax.random.uniform(kwi, (n_hid, n_inp), jnp.float32, -bound_i, bound_i)
    bi = jax.random.uniform(kbi, (n_hid,), jnp.float32, -bound_i, bound_i)
    wh = jax.random.uniform(kwh, (n_hid, 2 * n_hid), jnp.float32,
                            -bound_h, bound_h)

    ref = cornn_reference(x, wi, bi, wh, dt=dt, gamma=gamma, epsilon=epsilon)

    # 1) f32 weights: tight check against the pure-JAX reference.
    out = cornn_forward(x, wi, bi, wh, dt=dt, gamma=gamma, epsilon=epsilon,
                        mxu_dtype=jnp.float32)
    out = jax.block_until_ready(out)
    assert out.shape == (B, n_hid)
    assert jnp.allclose(out, ref, atol=1e-4, rtol=1e-4), (
        f"max abs err {jnp.max(jnp.abs(out - ref))}")

    # 2) time_chunk that does NOT divide T: exercises the masked-remainder path.
    out_rem = cornn_forward(x, wi, bi, wh, dt=dt, gamma=gamma, epsilon=epsilon,
                            mxu_dtype=jnp.float32, time_chunk=3)
    out_rem = jax.block_until_ready(out_rem)
    assert jnp.allclose(out_rem, ref, atol=1e-4, rtol=1e-4), (
        f"max abs err (remainder path) {jnp.max(jnp.abs(out_rem - ref))}")

    # 3) Default path (bf16 weights on the MXU, f32 state/accumulation).
    out_bf16 = cornn_forward(x, wi, bi, wh, dt=dt, gamma=gamma, epsilon=epsilon)
    out_bf16 = jax.block_until_ready(out_bf16)
    assert jnp.allclose(out_bf16, ref, atol=5e-2, rtol=5e-2), (
        f"max abs err (bf16 weights) {jnp.max(jnp.abs(out_bf16 - ref))}")

    print("KERNEL_OK")
</pallas_src>

<mosaic_0001>
module attributes {stable_mosaic.version = 11 : i64} {
  func.func @kernel(%arg0: i32, %arg1: i32, %arg2: memref<8x8x256xf32, #tpu.memory_space<vmem>>, %arg3: memref<256x256xf32, #tpu.memory_space<vmem>>, %arg4: memref<256x256xf32, #tpu.memory_space<vmem>>, %arg5: memref<8x256xf32, #tpu.memory_space<vmem>>, %arg6: memref<8x256xf32, #tpu.memory_space<vmem>>, %arg7: memref<8x256xf32, #tpu.memory_space<vmem>>) attributes {dimension_semantics = [#tpu.dimension_semantics<parallel>, #tpu.dimension_semantics<arbitrary>], iteration_bounds = array<i64: 1, 1>, scalar_prefetch = 0 : i64, scratch_operands = 2 : i64, tpu.core_type = #tpu.core_type<tc>, window_params = [{transform_indices = @transform_0, window_bounds = array<i64: 8, 8, 256>}, {pipeline_mode = #tpu.pipeline_mode<synchronous>, transform_indices = @transform_1, window_bounds = array<i64: 256, 256>}, {pipeline_mode = #tpu.pipeline_mode<synchronous>, transform_indices = @transform_2, window_bounds = array<i64: 256, 256>}, {transform_indices = @transform_3, window_bounds = array<i64: 8, 256>}]} {
    %c0_i32 = arith.constant 0 : i32
    %0 = arith.cmpi eq, %arg1, %c0_i32 : i32
    %1 = arith.extui %0 : i1 to i32
    %c0_i32_0 = arith.constant 0 : i32
    %2 = arith.cmpi ne, %1, %c0_i32_0 : i32
    scf.if %2 {
      %cst_78 = arith.constant 0.000000e+00 : f32
      %164 = vector.broadcast %cst_78 : f32 to vector<8x256xf32>
      %c0_79 = arith.constant 0 : index
      %c0_80 = arith.constant 0 : index
      %165 = vector.load %arg6[%c0_79, %c0_80] : memref<8x256xf32, #tpu.memory_space<vmem>>, vector<8x256xf32>
      tpu.vector_store %arg6[%c0_79, %c0_80], %164 {strides = array<i32>} : memref<8x256xf32, #tpu.memory_space<vmem>>, vector<8x256xf32>,
      %cst_81 = arith.constant 0.000000e+00 : f32
      %166 = vector.broadcast %cst_81 : f32 to vector<8x256xf32>
      %c0_82 = arith.constant 0 : index
      %c0_83 = arith.constant 0 : index
      %167 = vector.load %arg7[%c0_82, %c0_83] : memref<8x256xf32, #tpu.memory_space<vmem>>, vector<8x256xf32>
      tpu.vector_store %arg7[%c0_82, %c0_83], %166 {strides = array<i32>} : memref<8x256xf32, #tpu.memory_space<vmem>>, vector<8x256xf32>,
    } else {
    }
    %c0 = arith.constant 0 : index
    %c0_1 = arith.constant 0 : index
    %3 = vector.load %arg3[%c0, %c0_1] : memref<256x256xf32, #tpu.memory_space<vmem>>, vector<256x256xf32>
    %c0_2 = arith.constant 0 : index
    %c0_3 = arith.constant 0 : index
    %4 = vector.load %arg4[%c0_2, %c0_3] : memref<256x256xf32, #tpu.memory_space<vmem>>, vector<256x256xf32>
    %c0_4 = arith.constant 0 : index
    %c0_5 = arith.constant 0 : index
    %5 = vector.load %arg6[%c0_4, %c0_5] : memref<8x256xf32, #tpu.memory_space<vmem>>, vector<8x256xf32>
    %c0_6 = arith.constant 0 : index
    %c0_7 = arith.constant 0 : index
    %6 = vector.load %arg7[%c0_6, %c0_7] : memref<8x256xf32, #tpu.memory_space<vmem>>, vector<8x256xf32>
    %c0_i32_8 = arith.constant 0 : i32
    %cst = arith.constant dense<0.000000e+00> : vector<8x256xf32>
    %7 = tpu.matmul %5, %3, %cst {dimension_numbers = #tpu.dot_dimension_numbers<[1], [0], [0], [1], [0, 0, 1, 1], [], []>} : vector<8x256xf32>, vector<256x256xf32>, vector<8x256xf32> -> vector<8x256xf32>
    %cst_9 = arith.constant dense<0.000000e+00> : vector<8x256xf32>
    %8 = tpu.matmul %6, %4, %cst_9 {dimension_numbers = #tpu.dot_dimension_numbers<[1], [0], [0], [1], [0, 0, 1, 1], [], []>} : vector<8x256xf32>, vector<256x256xf32>, vector<8x256xf32> -> vector<8x256xf32>
    %9 = arith.addf %7, %8 : vector<8x256xf32>
    %10 = arith.index_cast %c0_i32_8 : i32 to index
    %c0_10 = arith.constant 0 : index
    %c0_11 = arith.constant 0 : index
    %11 = vector.load %arg2[%10, %c0_10, %c0_11] : memref<8x8x256xf32, #tpu.memory_space<vmem>>, vector<1x8x256xf32>
    %12 = vector.shape_cast %11 : vector<1x8x256xf32> to vector<8x256xf32>
    %13 = arith.addf %9, %12 : vector<8x256xf32>
    %cst_12 = arith.constant 8.026000e-01 : f32
    %14 = vector.broadcast %cst_12 : f32 to vector<8x256xf32>
    %15 = arith.mulf %14, %5 : vector<8x256xf32>
    %cst_13 = arith.constant 1.134000e-01 : f32
    %16 = vector.broadcast %cst_13 : f32 to vector<8x256xf32>
    %17 = arith.mulf %16, %6 : vector<8x256xf32>
    %18 = arith.subf %15, %17 : vector<8x256xf32>
    %19 = math.tanh %13 : vector<8x256xf32>
    %cst_14 = arith.constant 4.200000e-02 : f32
    %20 = vector.broadcast %cst_14 : f32 to vector<8x256xf32>
    %21 = arith.mulf %20, %19 : vector<8x256xf32>
    %22 = arith.addf %18, %21 : vector<8x256xf32>
    %cst_15 = arith.constant 4.200000e-02 : f32
    %23 = vector.broadcast %cst_15 : f32 to vector<8x256xf32>
    %24 = arith.mulf %23, %22 : vector<8x256xf32>
    %25 = arith.addf %6, %24 : vector<8x256xf32>
    %c1_i32 = arith.constant 1 : i32
    %cst_16 = arith.constant dense<0.000000e+00> : vector<8x256xf32>
    %26 = tpu.matmul %22, %3, %cst_16 {dimension_numbers = #tpu.dot_dimension_numbers<[1], [0], [0], [1], [0, 0, 1, 1], [], []>} : vector<8x256xf32>, vector<256x256xf32>, vector<8x256xf32> -> vector<8x256xf32>
    %cst_17 = arith.constant dense<0.000000e+00> : vector<8x256xf32>
    %27 = tpu.matmul %25, %4, %cst_17 {dimension_numbers = #tpu.dot_dimension_numbers<[1], [0], [0], [1], [0, 0, 1, 1], [], []>} : vector<8x256xf32>, vector<256x256xf32>, vector<8x256xf32> -> vector<8x256xf32>
    %28 = arith.addf %26, %27 : vector<8x256xf32>
    %29 = arith.index_cast %c1_i32 : i32 to index
    %c0_18 = arith.constant 0 : index
    %c0_19 = arith.constant 0 : index
    %30 = vector.load %arg2[%29, %c0_18, %c0_19] : memref<8x8x256xf32, #tpu.memory_space<vmem>>, vector<1x8x256xf32>
    %31 = vector.shape_cast %30 : vector<1x8x256xf32> to vector<8x256xf32>
    %32 = arith.addf %28, %31 : vector<8x256xf32>
    %cst_20 = arith.constant 8.026000e-01 : f32
    %33 = vector.broadcast %cst_20 : f32 to vector<8x256xf32>
    %34 = arith.mulf %33, %22 : vector<8x256xf32>
    %cst_21 = arith.constant 1.134000e-01 : f32
    %35 = vector.broadcast %cst_21 : f32 to vector<8x256xf32>
    %36 = arith.mulf %35, %25 : vector<8x256xf32>
    %37 = arith.subf %34, %36 : vector<8x256xf32>
    %38 = math.tanh %32 : vector<8x256xf32>
    %cst_22 = arith.constant 4.200000e-02 : f32
    %39 = vector.broadcast %cst_22 : f32 to vector<8x256xf32>
    %40 = arith.mulf %39, %38 : vector<8x256xf32>
    %41 = arith.addf %37, %40 : vector<8x256xf32>
    %cst_23 = arith.constant 4.200000e-02 : f32
    %42 = vector.broadcast %cst_23 : f32 to vector<8x256xf32>
    %43 = arith.mulf %42, %41 : vector<8x256xf32>
    %44 = arith.addf %25, %43 : vector<8x256xf32>
    %c2_i32 = arith.constant 2 : i32
    %cst_24 = arith.constant dense<0.000000e+00> : vector<8x256xf32>
    %45 = tpu.matmul %41, %3, %cst_24 {dimension_numbers = #tpu.dot_dimension_numbers<[1], [0], [0], [1], [0, 0, 1, 1], [], []>} : vector<8x256xf32>, vector<256x256xf32>, vector<8x256xf32> -> vector<8x256xf32>
    %cst_25 = arith.constant dense<0.000000e+00> : vector<8x256xf32>
    %46 = tpu.matmul %44, %4, %cst_25 {dimension_numbers = #tpu.dot_dimension_numbers<[1], [0], [0], [1], [0, 0, 1, 1], [], []>} : vector<8x256xf32>, vector<256x256xf32>, vector<8x256xf32> -> vector<8x256xf32>
    %47 = arith.addf %45, %46 : vector<8x256xf32>
    %48 = arith.index_cast %c2_i32 : i32 to index
    %c0_26 = arith.constant 0 : index
    %c0_27 = arith.constant 0 : index
    %49 = vector.load %arg2[%48, %c0_26, %c0_27] : memref<8x8x256xf32, #tpu.memory_space<vmem>>, vector<1x8x256xf32>
    %50 = vector.shape_cast %49 : vector<1x8x256xf32> to vector<8x256xf32>
    %51 = arith.addf %47, %50 : vector<8x256xf32>
    %cst_28 = arith.constant 8.026000e-01 : f32
    %52 = vector.broadcast %cst_28 : f32 to vector<8x256xf32>
    %53 = arith.mulf %52, %41 : vector<8x256xf32>
    %cst_29 = arith.constant 1.134000e-01 : f32
    %54 = vector.broadcast %cst_29 : f32 to vector<8x256xf32>
    %55 = arith.mulf %54, %44 : vector<8x256xf32>
    %56 = arith.subf %53, %55 : vector<8x256xf32>
    %57 = math.tanh %51 : vector<8x256xf32>
    %cst_30 = arith.constant 4.200000e-02 : f32
    %58 = vector.broadcast %cst_30 : f32 to vector<8x256xf32>
    %59 = arith.mulf %58, %57 : vector<8x256xf32>
    %60 = arith.addf %56, %59 : vector<8x256xf32>
    %cst_31 = arith.constant 4.200000e-02 : f32
    %61 = vector.broadcast %cst_31 : f32 to vector<8x256xf32>
    %62 = arith.mulf %61, %60 : vector<8x256xf32>
    %63 = arith.addf %44, %62 : vector<8x256xf32>
    %c3_i32 = arith.constant 3 : i32
    %cst_32 = arith.constant dense<0.000000e+00> : vector<8x256xf32>
    %64 = tpu.matmul %60, %3, %cst_32 {dimension_numbers = #tpu.dot_dimension_numbers<[1], [0], [0], [1], [0, 0, 1, 1], [], []>} : vector<8x256xf32>, vector<256x256xf32>, vector<8x256xf32> -> vector<8x256xf32>
    %cst_33 = arith.constant dense<0.000000e+00> : vector<8x256xf32>
    %65 = tpu.matmul %63, %4, %cst_33 {dimension_numbers = #tpu.dot_dimension_numbers<[1], [0], [0], [1], [0, 0, 1, 1], [], []>} : vector<8x256xf32>, vector<256x256xf32>, vector<8x256xf32> -> vector<8x256xf32>
    %66 = arith.addf %64, %65 : vector<8x256xf32>
    %67 = arith.index_cast %c3_i32 : i32 to index
    %c0_34 = arith.constant 0 : index
    %c0_35 = arith.constant 0 : index
    %68 = vector.load %arg2[%67, %c0_34, %c0_35] : memref<8x8x256xf32, #tpu.memory_space<vmem>>, vector<1x8x256xf32>
    %69 = vector.shape_cast %68 : vector<1x8x256xf32> to vector<8x256xf32>
    %70 = arith.addf %66, %69 : vector<8x256xf32>
    %cst_36 = arith.constant 8.026000e-01 : f32
    %71 = vector.broadcast %cst_36 : f32 to vector<8x256xf32>
    %72 = arith.mulf %71, %60 : vector<8x256xf32>
    %cst_37 = arith.constant 1.134000e-01 : f32
    %73 = vector.broadcast %cst_37 : f32 to vector<8x256xf32>
    %74 = arith.mulf %73, %63 : vector<8x256xf32>
    %75 = arith.subf %72, %74 : vector<8x256xf32>
    %76 = math.tanh %70 : vector<8x256xf32>
    %cst_38 = arith.constant 4.200000e-02 : f32
    %77 = vector.broadcast %cst_38 : f32 to vector<8x256xf32>
    %78 = arith.mulf %77, %76 : vector<8x256xf32>
    %79 = arith.addf %75, %78 : vector<8x256xf32>
    %cst_39 = arith.constant 4.200000e-02 : f32
    %80 = vector.broadcast %cst_39 : f32 to vector<8x256xf32>
    %81 = arith.mulf %80, %79 : vector<8x256xf32>
    %82 = arith.addf %63, %81 : vector<8x256xf32>
    %c4_i32 = arith.constant 4 : i32
    %cst_40 = arith.constant dense<0.000000e+00> : vector<8x256xf32>
    %83 = tpu.matmul %79, %3, %cst_40 {dimension_numbers = #tpu.dot_dimension_numbers<[1], [0], [0], [1], [0, 0, 1, 1], [], []>} : vector<8x256xf32>, vector<256x256xf32>, vector<8x256xf32> -> vector<8x256xf32>
    %cst_41 = arith.constant dense<0.000000e+00> : vector<8x256xf32>
    %84 = tpu.matmul %82, %4, %cst_41 {dimension_numbers = #tpu.dot_dimension_numbers<[1], [0], [0], [1], [0, 0, 1, 1], [], []>} : vector<8x256xf32>, vector<256x256xf32>, vector<8x256xf32> -> vector<8x256xf32>
    %85 = arith.addf %83, %84 : vector<8x256xf32>
    %86 = arith.index_cast %c4_i32 : i32 to index
    %c0_42 = arith.constant 0 : index
    %c0_43 = arith.constant 0 : index
    %87 = vector.load %arg2[%86, %c0_42, %c0_43] : memref<8x8x256xf32, #tpu.memory_space<vmem>>, vector<1x8x256xf32>
    %88 = vector.shape_cast %87 : vector<1x8x256xf32> to vector<8x256xf32>
    %89 = arith.addf %85, %88 : vector<8x256xf32>
    %cst_44 = arith.constant 8.026000e-01 : f32
    %90 = vector.broadcast %cst_44 : f32 to vector<8x256xf32>
    %91 = arith.mulf %90, %79 : vector<8x256xf32>
    %cst_45 = arith.constant 1.134000e-01 : f32
    %92 = vector.broadcast %cst_45 : f32 to vector<8x256xf32>
    %93 = arith.mulf %92, %82 : vector<8x256xf32>
    %94 = arith.subf %91, %93 : vector<8x256xf32>
    %95 = math.tanh %89 : vector<8x256xf32>
    %cst_46 = arith.constant 4.200000e-02 : f32
    %96 = vector.broadcast %cst_46 : f32 to vector<8x256xf32>
    %97 = arith.mulf %96, %95 : vector<8x256xf32>
    %98 = arith.addf %94, %97 : vector<8x256xf32>
    %cst_47 = arith.constant 4.200000e-02 : f32
    %99 = vector.broadcast %cst_47 : f32 to vector<8x256xf32>
    %100 = arith.mulf %99, %98 : vector<8x256xf32>
    %101 = arith.addf %82, %100 : vector<8x256xf32>
    %c5_i32 = arith.constant 5 : i32
    %cst_48 = arith.constant dense<0.000000e+00> : vector<8x256xf32>
    %102 = tpu.matmul %98, %3, %cst_48 {dimension_numbers = #tpu.dot_dimension_numbers<[1], [0], [0], [1], [0, 0, 1, 1], [], []>} : vector<8x256xf32>, vector<256x256xf32>, vector<8x256xf32> -> vector<8x256xf32>
    %cst_49 = arith.constant dense<0.000000e+00> : vector<8x256xf32>
    %103 = tpu.matmul %101, %4, %cst_49 {dimension_numbers = #tpu.dot_dimension_numbers<[1], [0], [0], [1], [0, 0, 1, 1], [], []>} : vector<8x256xf32>, vector<256x256xf32>, vector<8x256xf32> -> vector<8x256xf32>
    %104 = arith.addf %102, %103 : vector<8x256xf32>
    %105 = arith.index_cast %c5_i32 : i32 to index
    %c0_50 = arith.constant 0 : index
    %c0_51 = arith.constant 0 : index
    %106 = vector.load %arg2[%105, %c0_50, %c0_51] : memref<8x8x256xf32, #tpu.memory_space<vmem>>, vector<1x8x256xf32>
    %107 = vector.shape_cast %106 : vector<1x8x256xf32> to vector<8x256xf32>
    %108 = arith.addf %104, %107 : vector<8x256xf32>
    %cst_52 = arith.constant 8.026000e-01 : f32
    %109 = vector.broadcast %cst_52 : f32 to vector<8x256xf32>
    %110 = arith.mulf %109, %98 : vector<8x256xf32>
    %cst_53 = arith.constant 1.134000e-01 : f32
    %111 = vector.broadcast %cst_53 : f32 to vector<8x256xf32>
    %112 = arith.mulf %111, %101 : vector<8x256xf32>
    %113 = arith.subf %110, %112 : vector<8x256xf32>
    %114 = math.tanh %108 : vector<8x256xf32>
    %cst_54 = arith.constant 4.200000e-02 : f32
    %115 = vector.broadcast %cst_54 : f32 to vector<8x256xf32>
    %116 = arith.mulf %115, %114 : vector<8x256xf32>
    %117 = arith.addf %113, %116 : vector<8x256xf32>
    %cst_55 = arith.constant 4.200000e-02 : f32
    %118 = vector.broadcast %cst_55 : f32 to vector<8x256xf32>
    %119 = arith.mulf %118, %117 : vector<8x256xf32>
    %120 = arith.addf %101, %119 : vector<8x256xf32>
    %c6_i32 = arith.constant 6 : i32
    %cst_56 = arith.constant dense<0.000000e+00> : vector<8x256xf32>
    %121 = tpu.matmul %117, %3, %cst_56 {dimension_numbers = #tpu.dot_dimension_numbers<[1], [0], [0], [1], [0, 0, 1, 1], [], []>} : vector<8x256xf32>, vector<256x256xf32>, vector<8x256xf32> -> vector<8x256xf32>
    %cst_57 = arith.constant dense<0.000000e+00> : vector<8x256xf32>
    %122 = tpu.matmul %120, %4, %cst_57 {dimension_numbers = #tpu.dot_dimension_numbers<[1], [0], [0], [1], [0, 0, 1, 1], [], []>} : vector<8x256xf32>, vector<256x256xf32>, vector<8x256xf32> -> vector<8x256xf32>
    %123 = arith.addf %121, %122 : vector<8x256xf32>
    %124 = arith.index_cast %c6_i32 : i32 to index
    %c0_58 = arith.constant 0 : index
    %c0_59 = arith.constant 0 : index
    %125 = vector.load %arg2[%124, %c0_58, %c0_59] : memref<8x8x256xf32, #tpu.memory_space<vmem>>, vector<1x8x256xf32>
    %126 = vector.shape_cast %125 : vector<1x8x256xf32> to vector<8x256xf32>
    %127 = arith.addf %123, %126 : vector<8x256xf32>
    %cst_60 = arith.constant 8.026000e-01 : f32
    %128 = vector.broadcast %cst_60 : f32 to vector<8x256xf32>
    %129 = arith.mulf %128, %117 : vector<8x256xf32>
    %cst_61 = arith.constant 1.134000e-01 : f32
    %130 = vector.broadcast %cst_61 : f32 to vector<8x256xf32>
    %131 = arith.mulf %130, %120 : vector<8x256xf32>
    %132 = arith.subf %129, %131 : vector<8x256xf32>
    %133 = math.tanh %127 : vector<8x256xf32>
    %cst_62 = arith.constant 4.200000e-02 : f32
    %134 = vector.broadcast %cst_62 : f32 to vector<8x256xf32>
    %135 = arith.mulf %134, %133 : vector<8x256xf32>
    %136 = arith.addf %132, %135 : vector<8x256xf32>
    %cst_63 = arith.constant 4.200000e-02 : f32
    %137 = vector.broadcast %cst_63 : f32 to vector<8x256xf32>
    %138 = arith.mulf %137, %136 : vector<8x256xf32>
    %139 = arith.addf %120, %138 : vector<8x256xf32>
    %c7_i32 = arith.constant 7 : i32
    %cst_64 = arith.constant dense<0.000000e+00> : vector<8x256xf32>
    %140 = tpu.matmul %136, %3, %cst_64 {dimension_numbers = #tpu.dot_dimension_numbers<[1], [0], [0], [1], [0, 0, 1, 1], [], []>} : vector<8x256xf32>, vector<256x256xf32>, vector<8x256xf32> -> vector<8x256xf32>
    %cst_65 = arith.constant dense<0.000000e+00> : vector<8x256xf32>
    %141 = tpu.matmul %139, %4, %cst_65 {dimension_numbers = #tpu.dot_dimension_numbers<[1], [0], [0], [1], [0, 0, 1, 1], [], []>} : vector<8x256xf32>, vector<256x256xf32>, vector<8x256xf32> -> vector<8x256xf32>
    %142 = arith.addf %140, %141 : vector<8x256xf32>
    %143 = arith.index_cast %c7_i32 : i32 to index
    %c0_66 = arith.constant 0 : index
    %c0_67 = arith.constant 0 : index
    %144 = vector.load %arg2[%143, %c0_66, %c0_67] : memref<8x8x256xf32, #tpu.memory_space<vmem>>, vector<1x8x256xf32>
    %145 = vector.shape_cast %144 : vector<1x8x256xf32> to vector<8x256xf32>
    %146 = arith.addf %142, %145 : vector<8x256xf32>
    %cst_68 = arith.constant 8.026000e-01 : f32
    %147 = vector.broadcast %cst_68 : f32 to vector<8x256xf32>
    %148 = arith.mulf %147, %136 : vector<8x256xf32>
    %cst_69 = arith.constant 1.134000e-01 : f32
    %149 = vector.broadcast %cst_69 : f32 to vector<8x256xf32>
    %150 = arith.mulf %149, %139 : vector<8x256xf32>
    %151 = arith.subf %148, %150 : vector<8x256xf32>
    %152 = math.tanh %146 : vector<8x256xf32>
    %cst_70 = arith.constant 4.200000e-02 : f32
    %153 = vector.broadcast %cst_70 : f32 to vector<8x256xf32>
    %154 = arith.mulf %153, %152 : vector<8x256xf32>
    %155 = arith.addf %151, %154 : vector<8x256xf32>
    %cst_71 = arith.constant 4.200000e-02 : f32
    %156 = vector.broadcast %cst_71 : f32 to vector<8x256xf32>
    %157 = arith.mulf %156, %155 : vector<8x256xf32>
    %158 = arith.addf %139, %157 : vector<8x256xf32>
    %c8_i32 = arith.constant 8 : i32
    %c0_72 = arith.constant 0 : index
    %c0_73 = arith.constant 0 : index
    %159 = vector.load %arg6[%c0_72, %c0_73] : memref<8x256xf32, #tpu.memory_space<vmem>>, vector<8x256xf32>
    tpu.vector_store %arg6[%c0_72, %c0_73], %155 {strides = array<i32>} : memref<8x256xf32, #tpu.memory_space<vmem>>, vector<8x256xf32>,
    %c0_74 = arith.constant 0 : index
    %c0_75 = arith.constant 0 : index
    %160 = vector.load %arg7[%c0_74, %c0_75] : memref<8x256xf32, #tpu.memory_space<vmem>>, vector<8x256xf32>
    tpu.vector_store %arg7[%c0_74, %c0_75], %158 {strides = array<i32>} : memref<8x256xf32, #tpu.memory_space<vmem>>, vector<8x256xf32>,
    %c0_i32_76 = arith.constant 0 : i32
    %161 = arith.cmpi eq, %arg1, %c0_i32_76 : i32
    %162 = arith.extui %161 : i1 to i32
    %c0_i32_77 = arith.constant 0 : i32
    %163 = arith.cmpi ne, %162, %c0_i32_77 : i32
    scf.if %163 {
      %c0_78 = arith.constant 0 : index
      %c0_79 = arith.constant 0 : index
      %164 = vector.load %arg5[%c0_78, %c0_79] : memref<8x256xf32, #tpu.memory_space<vmem>>, vector<8x256xf32>
      tpu.vector_store %arg5[%c0_78, %c0_79], %158 {strides = array<i32>} : memref<8x256xf32, #tpu.memory_space<vmem>>, vector<8x256xf32>,
    } else {
    }
    return
  }
  func.func @transform_0(%arg0: i32, %arg1: i32) -> (i32, i32, i32) {
    %c0_i32 = arith.constant 0 : i32
    %c0_i32_0 = arith.constant 0 : i32
    return %arg1, %arg0, %c0_i32 : i32, i32, i32
  }
  func.func @transform_1(%arg0: i32, %arg1: i32) -> (i32, i32) {
    %c0_i32 = arith.constant 0 : i32
    %c0_i32_0 = arith.constant 0 : i32
    %c0_i32_1 = arith.constant 0 : i32
    return %c0_i32, %c0_i32_0 : i32, i32
  }
  func.func @transform_2(%arg0: i32, %arg1: i32) -> (i32, i32) {
    %c0_i32 = arith.constant 0 : i32
    %c0_i32_0 = arith.constant 0 : i32
    %c0_i32_1 = arith.constant 0 : i32
    return %c0_i32, %c0_i32_0 : i32, i32
  }
  func.func @transform_3(%arg0: i32, %arg1: i32) -> (i32, i32) {
    %c0_i32 = arith.constant 0 : i32
    %c0_i32_0 = arith.constant 0 : i32
    return %arg0, %c0_i32 : i32, i32
  }
}

</mosaic_0001>

<llo_original>
// kernel: tpu_custom_call.1
$region0: #{tpu_custom_call.1}
  #allocation0 [shape = 'u32[]', space=smem, size = 0x4, offset = 0x4, fixed_abs, tag = 'smem constant byte address 0x4 - core index']
  #allocation1 [shape = 'u32[144,128]{1,0:T(1,128)}', space=vmem, size = 0x12000, scoped, tag = 'internal scratch']
  #allocation2 [shape = 'f32[8,256]{1,0:T(8,128)}', space=vmem, size = 0x2000, scoped, tag = 'scratch operand']
  #allocation3 [shape = 'f32[8,256]{1,0:T(8,128)}', space=vmem, size = 0x2000, scoped, tag = 'scratch operand']
  %s0 = inlined_call_operand.hbm [shape: f32[8,8,256], index: 0, kind: input, shape index: {}]
  %s1 = inlined_call_operand.hbm [shape: f32[256,256], index: 1, kind: input, shape index: {}]
  %s2 = inlined_call_operand.hbm [shape: f32[256,256], index: 2, kind: input, shape index: {}]
  %s3 = inlined_call_operand.hbm [shape: f32[8,256], index: 3, kind: output, shape index: {}]
  %s4 = sld [smem:[#allocation0]]
  $region42: #{tpu_custom_call.1} parent=0
    _
  %s6 = ssub.s32 1, %s4
  %s7 = scalar_select 0, %s6, %s4
  $region1: #{tpu_custom_call.1} parent=0
    #allocation4 [shape = 'u8[65536]{0}', space=vmem, size = 0x10000, scoped, tag = 'input window, operand 0, single buffered']
    #allocation5 [shape = 's32[1]{0}', space=sflag, size = 0x4, scoped, tag = 'scoped memory for tpu_custom_call.1']
    #allocation6 [shape = 's32[1]{0}', space=sflag, size = 0x4, scoped, tag = 'scoped memory for tpu_custom_call.1']
    #allocation7 [shape = 'u8[262144]{0}', space=vmem, size = 0x40000, scoped, tag = 'input window, operand 1, single buffered']
    #allocation8 [shape = 's32[1]{0}', space=sflag, size = 0x4, scoped, tag = 'scoped memory for tpu_custom_call.1']
    #allocation9 [shape = 'u8[262144]{0}', space=vmem, size = 0x40000, scoped, tag = 'input window, operand 2, single buffered']
    #allocation10 [shape = 'u8[8192]{0}', space=vmem, size = 0x2000, scoped, tag = 'output window, operand 0, single buffered']
    %8 = vsyncpa [#allocation5], 0
    %9 = vsyncpa [#allocation8], 0
    %10 = vsyncpa [#allocation6], 0
    // Predicated region
    $region2: #{tpu_custom_call.1} parent=1 // pred_check
      _
    $region3: #{tpu_custom_call.1} parent=1 // pred_check_branch
      %12 = sbr.rel (0) target = $region5
    $region4: #{tpu_custom_call.1} parent=1 // pred_region
      %s14 = ssub.s32 2048, 2048
      %15 = vsyncadd [#allocation5], %s14
      %s16 = sshll.u32 [#allocation4], 4
      %s17 = int_to_ptr.vmem [resolvable:$true] %s16
      %22 = dma.hbm_to_vmem [thread:$0]  %s0, 2048, %s17, [#allocation5], 256, 256, 16
    $region5: #{tpu_custom_call.1} parent=1 // pred_fallthru
      _
    // Predicated region
    $region6: #{tpu_custom_call.1} parent=1 // pred_check
      _
    $region7: #{tpu_custom_call.1} parent=1 // pred_check_branch
      %24 = sbr.rel (0) target = $region9
    $region8: #{tpu_custom_call.1} parent=1 // pred_region
      %s26 = ssub.s32 8192, 8192
      %27 = vsyncadd [#allocation8], %s26
      %s28 = sshll.u32 [#allocation7], 4
      %s29 = int_to_ptr.vmem [resolvable:$true] %s28
      %34 = dma.hbm_to_vmem [thread:$0]  %s1, 8192, %s29, [#allocation8], 256, 256, 16
    $region9: #{tpu_custom_call.1} parent=1 // pred_fallthru
      _
    // Predicated region
    $region10: #{tpu_custom_call.1} parent=1 // pred_check
      _
    $region11: #{tpu_custom_call.1} parent=1 // pred_check_branch
      %36 = sbr.rel (0) target = $region13
    $region12: #{tpu_custom_call.1} parent=1 // pred_region
      %s38 = ssub.s32 8192, 8192
      %39 = vsyncadd [#allocation8], %s38
      %s40 = sshll.u32 [#allocation9], 4
      %s41 = int_to_ptr.vmem [resolvable:$true] %s40
      %46 = dma.hbm_to_vmem [thread:$0]  %s2, 8192, %s41, [#allocation8], 256, 256, 16
    $region13: #{tpu_custom_call.1} parent=1 // pred_fallthru
      _
    // Predicated region
    $region14: #{tpu_custom_call.1} parent=1 // pred_check
      _
    $region15: #{tpu_custom_call.1} parent=1 // pred_check_branch
      %48 = sbr.rel (0) target = $region17
    $region16: #{tpu_custom_call.1} parent=1 // pred_region
      %49 = dma.done [#allocation5], 2048
    $region17: #{tpu_custom_call.1} parent=1 // pred_fallthru
      _
    // Predicated region
    $region18: #{tpu_custom_call.1} parent=1 // pred_check
      _
    $region19: #{tpu_custom_call.1} parent=1 // pred_check_branch
      %51 = sbr.rel (0) target = $region21
    $region20: #{tpu_custom_call.1} parent=1 // pred_region
      %52 = dma.done [#allocation8], 8192
    $region21: #{tpu_custom_call.1} parent=1 // pred_fallthru
      _
    // Predicated region
    $region22: #{tpu_custom_call.1} parent=1 // pred_check
      _
    $region23: #{tpu_custom_call.1} parent=1 // pred_check_branch
      %54 = sbr.rel (0) target = $region25
    $region24: #{tpu_custom_call.1} parent=1 // pred_region
      %55 = dma.done [#allocation8], 8192
    $region25: #{tpu_custom_call.1} parent=1 // pred_fallthru
      _
    %p56 = scmp.eq.s32.totalorder 0, 0
    // Predicated region
    $region26: #{tpu_custom_call.1} parent=1 // pred_check
      %p57 = pneg %p56
    $region27: #{tpu_custom_call.1} parent=1 // pred_check_branch
      %59 = sbr.rel (%p57) target = $region29
    $region28: #{tpu_custom_call.1} parent=1 // pred_region
      %60 = vst [vmem:[#allocation2] sm:$0xff] 0.0
      %61 = vst [vmem:[#allocation2 + $0x8] sm:$0xff] 0.0
      %62 = vst [vmem:[#allocation3] sm:$0xff] 0.0
      %63 = vst [vmem:[#allocation3 + $0x8] sm:$0xff] 0.0
    $region29: #{tpu_custom_call.1} parent=1 // pred_fallthru
      _
    %v64 = vld [vmem:[#allocation7] sm:$0xff]
    %v65 = vld [vmem:[#allocation7 + $0x8] sm:$0xff]
    %v66 = vld [vmem:[#allocation7 + $0x10] sm:$0xff]
    %v67 = vld [vmem:[#allocation7 + $0x18] sm:$0xff]
    %v68 = vld [vmem:[#allocation7 + $0x20] sm:$0xff]
    %v69 = vld [vmem:[#allocation7 + $0x28] sm:$0xff]
    %v70 = vld [vmem:[#allocation7 + $0x30] sm:$0xff]
    %v71 = vld [vmem:[#allocation7 + $0x38] sm:$0xff]
    %v72 = vld [vmem:[#allocation7 + $0x40] sm:$0xff]
    %v73 = vld [vmem:[#allocation7 + $0x48] sm:$0xff]
    %v74 = vld [vmem:[#allocation7 + $0x50] sm:$0xff]
    %v75 = vld [vmem:[#allocation7 + $0x58] sm:$0xff]
    %v76 = vld [vmem:[#allocation7 + $0x60] sm:$0xff]
    %v77 = vld [vmem:[#allocation7 + $0x68] sm:$0xff]
    %v78 = vld [vmem:[#allocation7 + $0x70] sm:$0xff]
    %v79 = vld [vmem:[#allocation7 + $0x78] sm:$0xff]
    %v80 = vld [vmem:[#allocation7 + $0x80] sm:$0xff]
    %v81 = vld [vmem:[#allocation7 + $0x88] sm:$0xff]
    %v82 = vld [vmem:[#allocation7 + $0x90] sm:$0xff]
    %v83 = vld [vmem:[#allocation7 + $0x98] sm:$0xff]
    %v84 = vld [vmem:[#allocation7 + $0xa0] sm:$0xff]
    %v85 = vld [vmem:[#allocation7 + $0xa8] sm:$0xff]
    %v86 = vld [vmem:[#allocation7 + $0xb0] sm:$0xff]
    %v87 = vld [vmem:[#allocation7 + $0xb8] sm:$0xff]
    %v88 = vld [vmem:[#allocation7 + $0xc0] sm:$0xff]
    %v89 = vld [vmem:[#allocation7 + $0xc8] sm:$0xff]
    %v90 = vld [vmem:[#allocation7 + $0xd0] sm:$0xff]
    %v91 = vld [vmem:[#allocation7 + $0xd8] sm:$0xff]
    %v92 = vld [vmem:[#allocation7 + $0xe0] sm:$0xff]
    %v93 = vld [vmem:[#allocation7 + $0xe8] sm:$0xff]
    %v94 = vld [vmem:[#allocation7 + $0xf0] sm:$0xff]
    %v95 = vld [vmem:[#allocation7 + $0xf8] sm:$0xff]
    %v96 = vld [vmem:[#allocation7 + $0x100] sm:$0xff]
    %v97 = vld [vmem:[#allocation7 + $0x108] sm:$0xff]
    %v98 = vld [vmem:[#allocation7 + $0x110] sm:$0xff]
    %v99 = vld [vmem:[#allocation7 + $0x118] sm:$0xff]
    %v100 = vld [vmem:[#allocation7 + $0x120] sm:$0xff]
    %v101 = vld [vmem:[#allocation7 + $0x128] sm:$0xff]
    %v102 = vld [vmem:[#allocation7 + $0x130] sm:$0xff]
    %v103 = vld [vmem:[#allocation7 + $0x138] sm:$0xff]
    %v104 = vld [vmem:[#allocation7 + $0x140] sm:$0xff]
    %v105 = vld [vmem:[#allocation7 + $0x148] sm:$0xff]
    %v106 = vld [vmem:[#allocation7 + $0x150] sm:$0xff]
    %v107 = vld [vmem:[#allocation7 + $0x158] sm:$0xff]
    %v108 = vld [vmem:[#allocation7 + $0x160] sm:$0xff]
    %v109 = vld [vmem:[#allocation7 + $0x168] sm:$0xff]
    %v110 = vld [vmem:[#allocation7 + $0x170] sm:$0xff]
    %v111 = vld [vmem:[#allocation7 + $0x178] sm:$0xff]
    %v112 = vld [vmem:[#allocation7 + $0x180] sm:$0xff]
    %v113 = vld [vmem:[#allocation7 + $0x188] sm:$0xff]
    %v114 = vld [vmem:[#allocation7 + $0x190] sm:$0xff]
    %v115 = vld [vmem:[#allocation7 + $0x198] sm:$0xff]
    %v116 = vld [vmem:[#allocation7 + $0x1a0] sm:$0xff]
    %v117 = vld [vmem:[#allocation7 + $0x1a8] sm:$0xff]
    %v118 = vld [vmem:[#allocation7 + $0x1b0] sm:$0xff]
    %v119 = vld [vmem:[#allocation7 + $0x1b8] sm:$0xff]
    %v120 = vld [vmem:[#allocation7 + $0x1c0] sm:$0xff]
    %v121 = vld [vmem:[#allocation7 + $0x1c8] sm:$0xff]
    %v122 = vld [vmem:[#allocation7 + $0x1d0] sm:$0xff]
    %v123 = vld [vmem:[#allocation7 + $0x1d8] sm:$0xff]
    %v124 = vld [vmem:[#allocation7 + $0x1e0] sm:$0xff]
    %v125 = vld [vmem:[#allocation7 + $0x1e8] sm:$0xff]
    %v126 = vld [vmem:[#allocation7 + $0x1f0] sm:$0xff]
    %v127 = vld [vmem:[#allocation7 + $0x1f8] sm:$0xff]
    %v128 = vld [vmem:[#allocation9] sm:$0xff]
    %v129 = vld [vmem:[#allocation9 + $0x8] sm:$0xff]
    %v130 = vld [vmem:[#allocation9 + $0x10] sm:$0xff]
    %v131 = vld [vmem:[#allocation9 + $0x18] sm:$0xff]
    %v132 = vld [vmem:[#allocation9 + $0x20] sm:$0xff]
    %v133 = vld [vmem:[#allocation9 + $0x28] sm:$0xff]
    %v134 = vld [vmem:[#allocation9 + $0x30] sm:$0xff]
    %v135 = vld [vmem:[#allocation9 + $0x38] sm:$0xff]
    %v136 = vld [vmem:[#allocation9 + $0x40] sm:$0xff]
    %v137 = vld [vmem:[#allocation9 + $0x48] sm:$0xff]
    %v138 = vld [vmem:[#allocation9 + $0x50] sm:$0xff]
    %v139 = vld [vmem:[#allocation9 + $0x58] sm:$0xff]
    %v140 = vld [vmem:[#allocation9 + $0x60] sm:$0xff]
    %v141 = vld [vmem:[#allocation9 + $0x68] sm:$0xff]
    %v142 = vld [vmem:[#allocation9 + $0x70] sm:$0xff]
    %v143 = vld [vmem:[#allocation9 + $0x78] sm:$0xff]
    %v144 = vld [vmem:[#allocation9 + $0x80] sm:$0xff]
    %v145 = vld [vmem:[#allocation9 + $0x88] sm:$0xff]
    %v146 = vld [vmem:[#allocation9 + $0x90] sm:$0xff]
    %v147 = vld [vmem:[#allocation9 + $0x98] sm:$0xff]
    %v148 = vld [vmem:[#allocation9 + $0xa0] sm:$0xff]
    %v149 = vld [vmem:[#allocation9 + $0xa8] sm:$0xff]
    %v150 = vld [vmem:[#allocation9 + $0xb0] sm:$0xff]
    %v151 = vld [vmem:[#allocation9 + $0xb8] sm:$0xff]
    %v152 = vld [vmem:[#allocation9 + $0xc0] sm:$0xff]
    %v153 = vld [vmem:[#allocation9 + $0xc8] sm:$0xff]
    %v154 = vld [vmem:[#allocation9 + $0xd0] sm:$0xff]
    %v155 = vld [vmem:[#allocation9 + $0xd8] sm:$0xff]
    %v156 = vld [vmem:[#allocation9 + $0xe0] sm:$0xff]
    %v157 = vld [vmem:[#allocation9 + $0xe8] sm:$0xff]
    %v158 = vld [vmem:[#allocation9 + $0xf0] sm:$0xff]
    %v159 = vld [vmem:[#allocation9 + $0xf8] sm:$0xff]
    %v160 = vld [vmem:[#allocation9 + $0x100] sm:$0xff]
    %v161 = vld [vmem:[#allocation9 + $0x108] sm:$0xff]
    %v162 = vld [vmem:[#allocation9 + $0x110] sm:$0xff]
    %v163 = vld [vmem:[#allocation9 + $0x118] sm:$0xff]
    %v164 = vld [vmem:[#allocation9 + $0x120] sm:$0xff]
    %v165 = vld [vmem:[#allocation9 + $0x128] sm:$0xff]
    %v166 = vld [vmem:[#allocation9 + $0x130] sm:$0xff]
    %v167 = vld [vmem:[#allocation9 + $0x138] sm:$0xff]
    %v168 = vld [vmem:[#allocation9 + $0x140] sm:$0xff]
    %v169 = vld [vmem:[#allocation9 + $0x148] sm:$0xff]
    %v170 = vld [vmem:[#allocation9 + $0x150] sm:$0xff]
    %v171 = vld [vmem:[#allocation9 + $0x158] sm:$0xff]
    %v172 = vld [vmem:[#allocation9 + $0x160] sm:$0xff]
    %v173 = vld [vmem:[#allocation9 + $0x168] sm:$0xff]
    %v174 = vld [vmem:[#allocation9 + $0x170] sm:$0xff]
    %v175 = vld [vmem:[#allocation9 + $0x178] sm:$0xff]
    %v176 = vld [vmem:[#allocation9 + $0x180] sm:$0xff]
    %v177 = vld [vmem:[#allocation9 + $0x188] sm:$0xff]
    %v178 = vld [vmem:[#allocation9 + $0x190] sm:$0xff]
    %v179 = vld [vmem:[#allocation9 + $0x198] sm:$0xff]
    %v180 = vld [vmem:[#allocation9 + $0x1a0] sm:$0xff]
    %v181 = vld [vmem:[#allocation9 + $0x1a8] sm:$0xff]
    %v182 = vld [vmem:[#allocation9 + $0x1b0] sm:$0xff]
    %v183 = vld [vmem:[#allocation9 + $0x1b8] sm:$0xff]
    %v184 = vld [vmem:[#allocation9 + $0x1c0] sm:$0xff]
    %v185 = vld [vmem:[#allocation9 + $0x1c8] sm:$0xff]
    %v186 = vld [vmem:[#allocation9 + $0x1d0] sm:$0xff]
    %v187 = vld [vmem:[#allocation9 + $0x1d8] sm:$0xff]
    %v188 = vld [vmem:[#allocation9 + $0x1e0] sm:$0xff]
    %v189 = vld [vmem:[#allocation9 + $0x1e8] sm:$0xff]
    %v190 = vld [vmem:[#allocation9 + $0x1f0] sm:$0xff]
    %v191 = vld [vmem:[#allocation9 + $0x1f8] sm:$0xff]
    %v192 = vld [vmem:[#allocation2] sm:$0xff]
    %v193 = vld [vmem:[#allocation2 + $0x8] sm:$0xff]
    %v194 = vld [vmem:[#allocation3] sm:$0xff]
    %v195 = vld [vmem:[#allocation3 + $0x8] sm:$0xff]
    %196 = vmatprep.subr.mxu0 %v129
    %197 = vmatpush1.msra.mxu0 %v128
    %198 = vmatprep.subr.mxu0 %v131
    %199 = vmatpush1.msra.mxu0 %v130
    %200 = vmatprep.subr.mxu0 %v133
    %201 = vmatpush1.msra.mxu0 %v132
    %202 = vmatprep.subr.mxu0 %v135
    %203 = vmatpush1.msra.mxu0 %v134
    %204 = vmatprep.subr.mxu0 %v137
    %205 = vmatpush1.msra.mxu0 %v136
    %206 = vmatprep.subr.mxu0 %v139
    %207 = vmatpush1.msra.mxu0 %v138
    %208 = vmatprep.subr.mxu0 %v141
    %209 = vmatpush1.msra.mxu0 %v140
    %210 = vmatprep.subr.mxu0 %v143
    %211 = vmatpush1.msra.mxu0 %v142
    %212 = vmatprep.subr.mxu0 %v145
    %213 = vmatpush1.msra.mxu0 %v144
    %214 = vmatprep.subr.mxu0 %v147
    %215 = vmatpush1.msra.mxu0 %v146
    %216 = vmatprep.subr.mxu0 %v149
    %217 = vmatpush1.msra.mxu0 %v148
    %218 = vmatprep.subr.mxu0 %v151
    %219 = vmatpush1.msra.mxu0 %v150
    %220 = vmatprep.subr.mxu0 %v153
    %221 = vmatpush1.msra.mxu0 %v152
    %222 = vmatprep.subr.mxu0 %v155
    %223 = vmatpush1.msra.mxu0 %v154
    %224 = vmatprep.subr.mxu0 %v157
    %225 = vmatpush1.msra.mxu0 %v156
    %226 = vmatprep.subr.mxu0 %v159
    %227 = vmatpush1.msra.mxu0 %v158
    %228 = vmatprep.subr.mxu0 %v161
    %229 = vmatpush1.msra.mxu0 %v160
    %230 = vmatprep.subr.mxu0 %v163
    %231 = vmatpush1.msra.mxu0 %v162
    %232 = vmatprep.subr.mxu0 %v165
    %233 = vmatpush1.msra.mxu0 %v164
    %234 = vmatprep.subr.mxu0 %v167
    %235 = vmatpush1.msra.mxu0 %v166
    %236 = vmatprep.subr.mxu0 %v169
    %237 = vmatpush1.msra.mxu0 %v168
    %238 = vmatprep.subr.mxu0 %v171
    %239 = vmatpush1.msra.mxu0 %v170
    %240 = vmatprep.subr.mxu0 %v173
    %241 = vmatpush1.msra.mxu0 %v172
    %242 = vmatprep.subr.mxu0 %v175
    %243 = vmatpush1.msra.mxu0 %v174
    %244 = vmatprep.subr.mxu0 %v177
    %245 = vmatpush1.msra.mxu0 %v176
    %246 = vmatprep.subr.mxu0 %v179
    %247 = vmatpush1.msra.mxu0 %v178
    %248 = vmatprep.subr.mxu0 %v181
    %249 = vmatpush1.msra.mxu0 %v180
    %250 = vmatprep.subr.mxu0 %v183
    %251 = vmatpush1.msra.mxu0 %v182
    %252 = vmatprep.subr.mxu0 %v185
    %253 = vmatpush1.msra.mxu0 %v184
    %254 = vmatprep.subr.mxu0 %v187
    %255 = vmatpush1.msra.mxu0 %v186
    %256 = vmatprep.subr.mxu0 %v189
    %257 = vmatpush1.msra.mxu0 %v188
    %258 = vmatprep.subr.mxu0 %v191
    %259 = vmatpush1.msra.mxu0 %v190
    %260 = vmatprep.mubr.f32.mxu0 %v195
    %261 = vmatmul.mubr.f32.gmra.mrb[0].mxu0 %v194
    %v262 = vpop.f32.mrb[0].mxu0
    %v263 = vadd.f32 0.0, %v262
    %v264 = vpop.f32.mrb[0].mxu0
    %v265 = vadd.f32 0.0, %v264
    %266 = vdwg.mxu0
    %267 = vmatprep.subr.mxu0 %v65
    %268 = vmatpush1.msra.mxu0 %v64
    %269 = vmatprep.subr.mxu0 %v67
    %270 = vmatpush1.msra.mxu0 %v66
    %271 = vmatprep.subr.mxu0 %v69
    %272 = vmatpush1.msra.mxu0 %v68
    %273 = vmatprep.subr.mxu0 %v71
    %274 = vmatpush1.msra.mxu0 %v70
    %275 = vmatprep.subr.mxu0 %v73
    %276 = vmatpush1.msra.mxu0 %v72
    %277 = vmatprep.subr.mxu0 %v75
    %278 = vmatpush1.msra.mxu0 %v74
    %279 = vmatprep.subr.mxu0 %v77
    %280 = vmatpush1.msra.mxu0 %v76
    %281 = vmatprep.subr.mxu0 %v79
    %282 = vmatpush1.msra.mxu0 %v78
    %283 = vmatprep.subr.mxu0 %v81
    %284 = vmatpush1.msra.mxu0 %v80
    %285 = vmatprep.subr.mxu0 %v83
    %286 = vmatpush1.msra.mxu0 %v82
    %287 = vmatprep.subr.mxu0 %v85
    %288 = vmatpush1.msra.mxu0 %v84
    %289 = vmatprep.subr.mxu0 %v87
    %290 = vmatpush1.msra.mxu0 %v86
    %291 = vmatprep.subr.mxu0 %v89
    %292 = vmatpush1.msra.mxu0 %v88
    %293 = vmatprep.subr.mxu0 %v91
    %294 = vmatpush1.msra.mxu0 %v90
    %295 = vmatprep.subr.mxu0 %v93
    %296 = vmatpush1.msra.mxu0 %v92
    %297 = vmatprep.subr.mxu0 %v95
    %298 = vmatpush1.msra.mxu0 %v94
    %299 = vmatprep.subr.mxu0 %v97
    %300 = vmatpush1.msra.mxu0 %v96
    %301 = vmatprep.subr.mxu0 %v99
    %302 = vmatpush1.msra.mxu0 %v98
    %303 = vmatprep.subr.mxu0 %v101
    %304 = vmatpush1.msra.mxu0 %v100
    %305 = vmatprep.subr.mxu0 %v103
    %306 = vmatpush1.msra.mxu0 %v102
    %307 = vmatprep.subr.mxu0 %v105
    %308 = vmatpush1.msra.mxu0 %v104
    %309 = vmatprep.subr.mxu0 %v107
    %310 = vmatpush1.msra.mxu0 %v106
    %311 = vmatprep.subr.mxu0 %v109
    %312 = vmatpush1.msra.mxu0 %v108
    %313 = vmatprep.subr.mxu0 %v111
    %314 = vmatpush1.msra.mxu0 %v110
    %315 = vmatprep.subr.mxu0 %v113
    %316 = vmatpush1.msra.mxu0 %v112
    %317 = vmatprep.subr.mxu0 %v115
    %318 = vmatpush1.msra.mxu0 %v114
    %319 = vmatprep.subr.mxu0 %v117
    %320 = vmatpush1.msra.mxu0 %v116
    %321 = vmatprep.subr.mxu0 %v119
    %322 = vmatpush1.msra.mxu0 %v118
    %323 = vmatprep.subr.mxu0 %v121
    %324 = vmatpush1.msra.mxu0 %v120
    %325 = vmatprep.subr.mxu0 %v123
    %326 = vmatpush1.msra.mxu0 %v122
    %327 = vmatprep.subr.mxu0 %v125
    %328 = vmatpush1.msra.mxu0 %v124
    %329 = vmatprep.subr.mxu0 %v127
    %330 = vmatpush1.msra.mxu0 %v126
    %331 = vmatprep.mubr.f32.mxu0 %v193
    %332 = vmatmul.mubr.f32.gmra.mrb[0].mxu0 %v192
    %v333 = vpop.f32.mrb[0].mxu0
    %v334 = vadd.f32 %v263, %v333
    %v335 = vpop.f32.mrb[0].mxu0
    %v336 = vadd.f32 %v265, %v335
    %337 = vdwg.mxu0
    %v338 = vld [vmem:[#allocation4] sm:$0xff]
    %v339 = vld [vmem:[#allocation4 + $0x8] sm:$0xff]
    %v340 = vadd.f32 %v334, %v338
    %v341 = vadd.f32 %v336, %v339
    %v342 = vmul.f32 %v192, 0.8026
    %v343 = vmul.f32 %v193, 0.8026
    %v344 = vmul.f32 %v194, 0.1134
    %v345 = vmul.f32 %v195, 0.1134
    %v346 = vsub.f32 %v342, %v344
    %v347 = vsub.f32 %v343, %v345
    %v348 = vtanh.pop %v340
    %v349 = vtanh.pop %v341
    %v350 = vmul.f32 %v348, 0.042
    %v351 = vmul.f32 %v349, 0.042
    %v352 = vadd.f32 %v346, %v350
    %v353 = vadd.f32 %v347, %v351
    %v354 = vmul.f32 %v352, 0.042
    %v355 = vmul.f32 %v353, 0.042
    %v356 = vadd.f32 %v194, %v354
    %v357 = vadd.f32 %v195, %v355
    %358 = vmatprep.subr.mxu0 %v129
    %359 = vmatpush1.msra.mxu0 %v128
    %360 = vmatprep.subr.mxu0 %v131
    %361 = vmatpush1.msra.mxu0 %v130
    %362 = vmatprep.subr.mxu0 %v133
    %363 = vmatpush1.msra.mxu0 %v132
    %364 = vmatprep.subr.mxu0 %v135
    %365 = vmatpush1.msra.mxu0 %v134
    %366 = vmatprep.subr.mxu0 %v137
    %367 = vmatpush1.msra.mxu0 %v136
    %368 = vmatprep.subr.mxu0 %v139
    %369 = vmatpush1.msra.mxu0 %v138
    %370 = vmatprep.subr.mxu0 %v141
    %371 = vmatpush1.msra.mxu0 %v140
    %372 = vmatprep.subr.mxu0 %v143
    %373 = vmatpush1.msra.mxu0 %v142
    %374 = vmatprep.subr.mxu0 %v145
    %375 = vmatpush1.msra.mxu0 %v144
    %376 = vmatprep.subr.mxu0 %v147
    %377 = vmatpush1.msra.mxu0 %v146
    %378 = vmatprep.subr.mxu0 %v149
    %379 = vmatpush1.msra.mxu0 %v148
    %380 = vmatprep.subr.mxu0 %v151
    %381 = vmatpush1.msra.mxu0 %v150
    %382 = vmatprep.subr.mxu0 %v153
    %383 = vmatpush1.msra.mxu0 %v152
    %384 = vmatprep.subr.mxu0 %v155
    %385 = vmatpush1.msra.mxu0 %v154
    %386 = vmatprep.subr.mxu0 %v157
    %387 = vmatpush1.msra.mxu0 %v156
    %388 = vmatprep.subr.mxu0 %v159
    %389 = vmatpush1.msra.mxu0 %v158
    %390 = vmatprep.subr.mxu0 %v161
    %391 = vmatpush1.msra.mxu0 %v160
    %392 = vmatprep.subr.mxu0 %v163
    %393 = vmatpush1.msra.mxu0 %v162
    %394 = vmatprep.subr.mxu0 %v165
    %395 = vmatpush1.msra.mxu0 %v164
    %396 = vmatprep.subr.mxu0 %v167
    %397 = vmatpush1.msra.mxu0 %v166
    %398 = vmatprep.subr.mxu0 %v169
    %399 = vmatpush1.msra.mxu0 %v168
    %400 = vmatprep.subr.mxu0 %v171
    %401 = vmatpush1.msra.mxu0 %v170
    %402 = vmatprep.subr.mxu0 %v173
    %403 = vmatpush1.msra.mxu0 %v172
    %404 = vmatprep.subr.mxu0 %v175
    %405 = vmatpush1.msra.mxu0 %v174
    %406 = vmatprep.subr.mxu0 %v177
    %407 = vmatpush1.msra.mxu0 %v176
    %408 = vmatprep.subr.mxu0 %v179
    %409 = vmatpush1.msra.mxu0 %v178
    %410 = vmatprep.subr.mxu0 %v181
    %411 = vmatpush1.msra.mxu0 %v180
    %412 = vmatprep.subr.mxu0 %v183
    %413 = vmatpush1.msra.mxu0 %v182
    %414 = vmatprep.subr.mxu0 %v185
    %415 = vmatpush1.msra.mxu0 %v184
    %416 = vmatprep.subr.mxu0 %v187
    %417 = vmatpush1.msra.mxu0 %v186
    %418 = vmatprep.subr.mxu0 %v189
    %419 = vmatpush1.msra.mxu0 %v188
    %420 = vmatprep.subr.mxu0 %v191
    %421 = vmatpush1.msra.mxu0 %v190
    %422 = vmatprep.mubr.f32.mxu0 %v357
    %423 = vmatmul.mubr.f32.gmra.mrb[0].mxu0 %v356
    %v424 = vpop.f32.mrb[0].mxu0
    %v425 = vadd.f32 0.0, %v424
    %v426 = vpop.f32.mrb[0].mxu0
    %v427 = vadd.f32 0.0, %v426
    %428 = vdwg.mxu0
    %429 = vmatprep.subr.mxu0 %v65
    %430 = vmatpush1.msra.mxu0 %v64
    %431 = vmatprep.subr.mxu0 %v67
    %432 = vmatpush1.msra.mxu0 %v66
    %433 = vmatprep.subr.mxu0 %v69
    %434 = vmatpush1.msra.mxu0 %v68
    %435 = vmatprep.subr.mxu0 %v71
    %436 = vmatpush1.msra.mxu0 %v70
    %437 = vmatprep.subr.mxu0 %v73
    %438 = vmatpush1.msra.mxu0 %v72
    %439 = vmatprep.subr.mxu0 %v75
    %440 = vmatpush1.msra.mxu0 %v74
    %441 = vmatprep.subr.mxu0 %v77
    %442 = vmatpush1.msra.mxu0 %v76
    %443 = vmatprep.subr.mxu0 %v79
    %444 = vmatpush1.msra.mxu0 %v78
    %445 = vmatprep.subr.mxu0 %v81
    %446 = vmatpush1.msra.mxu0 %v80
    %447 = vmatprep.subr.mxu0 %v83
    %448 = vmatpush1.msra.mxu0 %v82
    %449 = vmatprep.subr.mxu0 %v85
    %450 = vmatpush1.msra.mxu0 %v84
    %451 = vmatprep.subr.mxu0 %v87
    %452 = vmatpush1.msra.mxu0 %v86
    %453 = vmatprep.subr.mxu0 %v89
    %454 = vmatpush1.msra.mxu0 %v88
    %455 = vmatprep.subr.mxu0 %v91
    %456 = vmatpush1.msra.mxu0 %v90
    %457 = vmatprep.subr.mxu0 %v93
    %458 = vmatpush1.msra.mxu0 %v92
    %459 = vmatprep.subr.mxu0 %v95
    %460 = vmatpush1.msra.mxu0 %v94
    %461 = vmatprep.subr.mxu0 %v97
    %462 = vmatpush1.msra.mxu0 %v96
    %463 = vmatprep.subr.mxu0 %v99
    %464 = vmatpush1.msra.mxu0 %v98
    %465 = vmatprep.subr.mxu0 %v101
    %466 = vmatpush1.msra.mxu0 %v100
    %467 = vmatprep.subr.mxu0 %v103
    %468 = vmatpush1.msra.mxu0 %v102
    %469 = vmatprep.subr.mxu0 %v105
    %470 = vmatpush1.msra.mxu0 %v104
    %471 = vmatprep.subr.mxu0 %v107
    %472 = vmatpush1.msra.mxu0 %v106
    %473 = vmatprep.subr.mxu0 %v109
    %474 = vmatpush1.msra.mxu0 %v108
    %475 = vmatprep.subr.mxu0 %v111
    %476 = vmatpush1.msra.mxu0 %v110
    %477 = vmatprep.subr.mxu0 %v113
    %478 = vmatpush1.msra.mxu0 %v112
    %479 = vmatprep.subr.mxu0 %v115
    %480 = vmatpush1.msra.mxu0 %v114
    %481 = vmatprep.subr.mxu0 %v117
    %482 = vmatpush1.msra.mxu0 %v116
    %483 = vmatprep.subr.mxu0 %v119
    %484 = vmatpush1.msra.mxu0 %v118
    %485 = vmatprep.subr.mxu0 %v121
    %486 = vmatpush1.msra.mxu0 %v120
    %487 = vmatprep.subr.mxu0 %v123
    %488 = vmatpush1.msra.mxu0 %v122
    %489 = vmatprep.subr.mxu0 %v125
    %490 = vmatpush1.msra.mxu0 %v124
    %491 = vmatprep.subr.mxu0 %v127
    %492 = vmatpush1.msra.mxu0 %v126
    %493 = vmatprep.mubr.f32.mxu0 %v353
    %494 = vmatmul.mubr.f32.gmra.mrb[0].mxu0 %v352
    %v495 = vpop.f32.mrb[0].mxu0
    %v496 = vadd.f32 %v425, %v495
    %v497 = vpop.f32.mrb[0].mxu0
    %v498 = vadd.f32 %v427, %v497
    %499 = vdwg.mxu0
    %s500 = scalar_lea.vmem [#allocation4], 16
    %v501 = vld [vmem:[%s500] sm:$0xff]
    %v502 = vld [vmem:[%s500 + $0x8] sm:$0xff]
    %v503 = vadd.f32 %v496, %v501
    %v504 = vadd.f32 %v498, %v502
    %v505 = vmul.f32 %v352, 0.8026
    %v506 = vmul.f32 %v353, 0.8026
    %v507 = vmul.f32 %v356, 0.1134
    %v508 = vmul.f32 %v357, 0.1134
    %v509 = vsub.f32 %v505, %v507
    %v510 = vsub.f32 %v506, %v508
    %v511 = vtanh.pop %v503
    %v512 = vtanh.pop %v504
    %v513 = vmul.f32 %v511, 0.042
    %v514 = vmul.f32 %v512, 0.042
    %v515 = vadd.f32 %v509, %v513
    %v516 = vadd.f32 %v510, %v514
    %v517 = vmul.f32 %v515, 0.042
    %v518 = vmul.f32 %v516, 0.042
    %v519 = vadd.f32 %v356, %v517
    %v520 = vadd.f32 %v357, %v518
    %521 = vmatprep.subr.mxu0 %v129
    %522 = vmatpush1.msra.mxu0 %v128
    %523 = vmatprep.subr.mxu0 %v131
    %524 = vmatpush1.msra.mxu0 %v130
    %525 = vmatprep.subr.mxu0 %v133
    %526 = vmatpush1.msra.mxu0 %v132
    %527 = vmatprep.subr.mxu0 %v135
    %528 = vmatpush1.msra.mxu0 %v134
    %529 = vmatprep.subr.mxu0 %v137
    %530 = vmatpush1.msra.mxu0 %v136
    %531 = vmatprep.subr.mxu0 %v139
    %532 = vmatpush1.msra.mxu0 %v138
    %533 = vmatprep.subr.mxu0 %v141
    %534 = vmatpush1.msra.mxu0 %v140
    %535 = vmatprep.subr.mxu0 %v143
    %536 = vmatpush1.msra.mxu0 %v142
    %537 = vmatprep.subr.mxu0 %v145
    %538 = vmatpush1.msra.mxu0 %v144
    %539 = vmatprep.subr.mxu0 %v147
    %540 = vmatpush1.msra.mxu0 %v146
    %541 = vmatprep.subr.mxu0 %v149
    %542 = vmatpush1.msra.mxu0 %v148
    %543 = vmatprep.subr.mxu0 %v151
    %544 = vmatpush1.msra.mxu0 %v150
    %545 = vmatprep.subr.mxu0 %v153
    %546 = vmatpush1.msra.mxu0 %v152
    %547 = vmatprep.subr.mxu0 %v155
    %548 = vmatpush1.msra.mxu0 %v154
    %549 = vmatprep.subr.mxu0 %v157
    %550 = vmatpush1.msra.mxu0 %v156
    %551 = vmatprep.subr.mxu0 %v159
    %552 = vmatpush1.msra.mxu0 %v158
    %553 = vmatprep.subr.mxu0 %v161
    %554 = vmatpush1.msra.mxu0 %v160
    %555 = vmatprep.subr.mxu0 %v163
    %556 = vmatpush1.msra.mxu0 %v162
    %557 = vmatprep.subr.mxu0 %v165
    %558 = vmatpush1.msra.mxu0 %v164
    %559 = vmatprep.subr.mxu0 %v167
    %560 = vmatpush1.msra.mxu0 %v166
    %561 = vmatprep.subr.mxu0 %v169
    %562 = vmatpush1.msra.mxu0 %v168
    %563 = vmatprep.subr.mxu0 %v171
    %564 = vmatpush1.msra.mxu0 %v170
    %565 = vmatprep.subr.mxu0 %v173
    %566 = vmatpush1.msra.mxu0 %v172
    %567 = vmatprep.subr.mxu0 %v175
    %568 = vmatpush1.msra.mxu0 %v174
    %569 = vmatprep.subr.mxu0 %v177
    %570 = vmatpush1.msra.mxu0 %v176
    %571 = vmatprep.subr.mxu0 %v179
    %572 = vmatpush1.msra.mxu0 %v178
    %573 = vmatprep.subr.mxu0 %v181
    %574 = vmatpush1.msra.mxu0 %v180
    %575 = vmatprep.subr.mxu0 %v183
    %576 = vmatpush1.msra.mxu0 %v182
    %577 = vmatprep.subr.mxu0 %v185
    %578 = vmatpush1.msra.mxu0 %v184
    %579 = vmatprep.subr.mxu0 %v187
    %580 = vmatpush1.msra.mxu0 %v186
    %581 = vmatprep.subr.mxu0 %v189
    %582 = vmatpush1.msra.mxu0 %v188
    %583 = vmatprep.subr.mxu0 %v191
    %584 = vmatpush1.msra.mxu0 %v190
    %585 = vmatprep.mubr.f32.mxu0 %v520
    %586 = vmatmul.mubr.f32.gmra.mrb[0].mxu0 %v519
    %v587 = vpop.f32.mrb[0].mxu0
    %v588 = vadd.f32 0.0, %v587
    %v589 = vpop.f32.mrb[0].mxu0
    %v590 = vadd.f32 0.0, %v589
    %591 = vdwg.mxu0
    %592 = vmatprep.subr.mxu0 %v65
    %593 = vmatpush1.msra.mxu0 %v64
    %594 = vmatprep.subr.mxu0 %v67
    %595 = vmatpush1.msra.mxu0 %v66
    %596 = vmatprep.subr.mxu0 %v69
    %597 = vmatpush1.msra.mxu0 %v68
    %598 = vmatprep.subr.mxu0 %v71
    %599 = vmatpush1.msra.mxu0 %v70
    %600 = vmatprep.subr.mxu0 %v73
    %601 = vmatpush1.msra.mxu0 %v72
    %602 = vmatprep.subr.mxu0 %v75
    %603 = vmatpush1.msra.mxu0 %v74
    %604 = vmatprep.subr.mxu0 %v77
    %605 = vmatpush1.msra.mxu0 %v76
    %606 = vmatprep.subr.mxu0 %v79
    %607 = vmatpush1.msra.mxu0 %v78
    %608 = vmatprep.subr.mxu0 %v81
    %609 = vmatpush1.msra.mxu0 %v80
    %610 = vmatprep.subr.mxu0 %v83
    %611 = vmatpush1.msra.mxu0 %v82
    %612 = vmatprep.subr.mxu0 %v85
    %613 = vmatpush1.msra.mxu0 %v84
    %614 = vmatprep.subr.mxu0 %v87
    %615 = vmatpush1.msra.mxu0 %v86
    %616 = vmatprep.subr.mxu0 %v89
    %617 = vmatpush1.msra.mxu0 %v88
    %618 = vmatprep.subr.mxu0 %v91
    %619 = vmatpush1.msra.mxu0 %v90
    %620 = vmatprep.subr.mxu0 %v93
    %621 = vmatpush1.msra.mxu0 %v92
    %622 = vmatprep.subr.mxu0 %v95
    %623 = vmatpush1.msra.mxu0 %v94
    %624 = vmatprep.subr.mxu0 %v97
    %625 = vmatpush1.msra.mxu0 %v96
    %626 = vmatprep.subr.mxu0 %v99
    %627 = vmatpush1.msra.mxu0 %v98
    %628 = vmatprep.subr.mxu0 %v101
    %629 = vmatpush1.msra.mxu0 %v100
    %630 = vmatprep.subr.mxu0 %v103
    %631 = vmatpush1.msra.mxu0 %v102
    %632 = vmatprep.subr.mxu0 %v105
    %633 = vmatpush1.msra.mxu0 %v104
    %634 = vmatprep.subr.mxu0 %v107
    %635 = vmatpush1.msra.mxu0 %v106
    %636 = vmatprep.subr.mxu0 %v109
    %637 = vmatpush1.msra.mxu0 %v108
    %638 = vmatprep.subr.mxu0 %v111
    %639 = vmatpush1.msra.mxu0 %v110
    %640 = vmatprep.subr.mxu0 %v113
    %641 = vmatpush1.msra.mxu0 %v112
    %642 = vmatprep.subr.mxu0 %v115
    %643 = vmatpush1.msra.mxu0 %v114
    %644 = vmatprep.subr.mxu0 %v117
    %645 = vmatpush1.msra.mxu0 %v116
    %646 = vmatprep.subr.mxu0 %v119
    %647 = vmatpush1.msra.mxu0 %v118
    %648 = vmatprep.subr.mxu0 %v121
    %649 = vmatpush1.msra.mxu0 %v120
    %650 = vmatprep.subr.mxu0 %v123
    %651 = vmatpush1.msra.mxu0 %v122
    %652 = vmatprep.subr.mxu0 %v125
    %653 = vmatpush1.msra.mxu0 %v124
    %654 = vmatprep.subr.mxu0 %v127
    %655 = vmatpush1.msra.mxu0 %v126
    %656 = vmatprep.mubr.f32.mxu0 %v516
    %657 = vmatmul.mubr.f32.gmra.mrb[0].mxu0 %v515
    %v658 = vpop.f32.mrb[0].mxu0
    %v659 = vadd.f32 %v588, %v658
    %v660 = vpop.f32.mrb[0].mxu0
    %v661 = vadd.f32 %v590, %v660
    %662 = vdwg.mxu0
    %s663 = scalar_lea.vmem [#allocation4], 32
    %v664 = vld [vmem:[%s663] sm:$0xff]
    %v665 = vld [vmem:[%s663 + $0x8] sm:$0xff]
    %v666 = vadd.f32 %v659, %v664
    %v667 = vadd.f32 %v661, %v665
    %v668 = vmul.f32 %v515, 0.8026
    %v669 = vmul.f32 %v516, 0.8026
    %v670 = vmul.f32 %v519, 0.1134
    %v671 = vmul.f32 %v520, 0.1134
    %v672 = vsub.f32 %v668, %v670
    %v673 = vsub.f32 %v669, %v671
    %v674 = vtanh.pop %v666
    %v675 = vtanh.pop %v667
    %v676 = vmul.f32 %v674, 0.042
    %v677 = vmul.f32 %v675, 0.042
    %v678 = vadd.f32 %v672, %v676
    %v679 = vadd.f32 %v673, %v677
    %v680 = vmul.f32 %v678, 0.042
    %v681 = vmul.f32 %v679, 0.042
    %v682 = vadd.f32 %v519, %v680
    %v683 = vadd.f32 %v520, %v681
    %684 = vmatprep.subr.mxu0 %v129
    %685 = vmatpush1.msra.mxu0 %v128
    %686 = vmatprep.subr.mxu0 %v131
    %687 = vmatpush1.msra.mxu0 %v130
    %688 = vmatprep.subr.mxu0 %v133
    %689 = vmatpush1.msra.mxu0 %v132
    %690 = vmatprep.subr.mxu0 %v135
    %691 = vmatpush1.msra.mxu0 %v134
    %692 = vmatprep.subr.mxu0 %v137
    %693 = vmatpush1.msra.mxu0 %v136
    %694 = vmatprep.subr.mxu0 %v139
    %695 = vmatpush1.msra.mxu0 %v138
    %696 = vmatprep.subr.mxu0 %v141
    %697 = vmatpush1.msra.mxu0 %v140
    %698 = vmatprep.subr.mxu0 %v143
    %699 = vmatpush1.msra.mxu0 %v142
    %700 = vmatprep.subr.mxu0 %v145
    %701 = vmatpush1.msra.mxu0 %v144
    %702 = vmatprep.subr.mxu0 %v147
    %703 = vmatpush1.msra.mxu0 %v146
    %704 = vmatprep.subr.mxu0 %v149
    %705 = vmatpush1.msra.mxu0 %v148
    %706 = vmatprep.subr.mxu0 %v151
    %707 = vmatpush1.msra.mxu0 %v150
    %708 = vmatprep.subr.mxu0 %v153
    %709 = vmatpush1.msra.mxu0 %v152
    %710 = vmatprep.subr.mxu0 %v155
    %711 = vmatpush1.msra.mxu0 %v154
    %712 = vmatprep.subr.mxu0 %v157
    %713 = vmatpush1.msra.mxu0 %v156
    %714 = vmatprep.subr.mxu0 %v159
    %715 = vmatpush1.msra.mxu0 %v158
    %716 = vmatprep.subr.mxu0 %v161
    %717 = vmatpush1.msra.mxu0 %v160
    %718 = vmatprep.subr.mxu0 %v163
    %719 = vmatpush1.msra.mxu0 %v162
    %720 = vmatprep.subr.mxu0 %v165
    %721 = vmatpush1.msra.mxu0 %v164
    %722 = vmatprep.subr.mxu0 %v167
    %723 = vmatpush1.msra.mxu0 %v166
    %724 = vmatprep.subr.mxu0 %v169
    %725 = vmatpush1.msra.mxu0 %v168
    %726 = vmatprep.subr.mxu0 %v171
    %727 = vmatpush1.msra.mxu0 %v170
    %728 = vmatprep.subr.mxu0 %v173
    %729 = vmatpush1.msra.mxu0 %v172
    %730 = vmatprep.subr.mxu0 %v175
    %731 = vmatpush1.msra.mxu0 %v174
    %732 = vmatprep.subr.mxu0 %v177
    %733 = vmatpush1.msra.mxu0 %v176
    %734 = vmatprep.subr.mxu0 %v179
    %735 = vmatpush1.msra.mxu0 %v178
    %736 = vmatprep.subr.mxu0 %v181
    %737 = vmatpush1.msra.mxu0 %v180
    %738 = vmatprep.subr.mxu0 %v183
    %739 = vmatpush1.msra.mxu0 %v182
    %740 = vmatprep.subr.mxu0 %v185
    %741 = vmatpush1.msra.mxu0 %v184
    %742 = vmatprep.subr.mxu0 %v187
    %743 = vmatpush1.msra.mxu0 %v186
    %744 = vmatprep.subr.mxu0 %v189
    %745 = vmatpush1.msra.mxu0 %v188
    %746 = vmatprep.subr.mxu0 %v191
    %747 = vmatpush1.msra.mxu0 %v190
    %748 = vmatprep.mubr.f32.mxu0 %v683
    %749 = vmatmul.mubr.f32.gmra.mrb[0].mxu0 %v682
    %v750 = vpop.f32.mrb[0].mxu0
    %v751 = vadd.f32 0.0, %v750
    %v752 = vpop.f32.mrb[0].mxu0
    %v753 = vadd.f32 0.0, %v752
    %754 = vdwg.mxu0
    %755 = vmatprep.subr.mxu0 %v65
    %756 = vmatpush1.msra.mxu0 %v64
    %757 = vmatprep.subr.mxu0 %v67
    %758 = vmatpush1.msra.mxu0 %v66
    %759 = vmatprep.subr.mxu0 %v69
    %760 = vmatpush1.msra.mxu0 %v68
    %761 = vmatprep.subr.mxu0 %v71
    %762 = vmatpush1.msra.mxu0 %v70
    %763 = vmatprep.subr.mxu0 %v73
    %764 = vmatpush1.msra.mxu0 %v72
    %765 = vmatprep.subr.mxu0 %v75
    %766 = vmatpush1.msra.mxu0 %v74
    %767 = vmatprep.subr.mxu0 %v77
    %768 = vmatpush1.msra.mxu0 %v76
    %769 = vmatprep.subr.mxu0 %v79
    %770 = vmatpush1.msra.mxu0 %v78
    %771 = vmatprep.subr.mxu0 %v81
    %772 = vmatpush1.msra.mxu0 %v80
    %773 = vmatprep.subr.mxu0 %v83
    %774 = vmatpush1.msra.mxu0 %v82
    %775 = vmatprep.subr.mxu0 %v85
    %776 = vmatpush1.msra.mxu0 %v84
    %777 = vmatprep.subr.mxu0 %v87
    %778 = vmatpush1.msra.mxu0 %v86
    %779 = vmatprep.subr.mxu0 %v89
    %780 = vmatpush1.msra.mxu0 %v88
    %781 = vmatprep.subr.mxu0 %v91
    %782 = vmatpush1.msra.mxu0 %v90
    %783 = vmatprep.subr.mxu0 %v93
    %784 = vmatpush1.msra.mxu0 %v92
    %785 = vmatprep.subr.mxu0 %v95
    %786 = vmatpush1.msra.mxu0 %v94
    %787 = vmatprep.subr.mxu0 %v97
    %788 = vmatpush1.msra.mxu0 %v96
    %789 = vmatprep.subr.mxu0 %v99
    %790 = vmatpush1.msra.mxu0 %v98
    %791 = vmatprep.subr.mxu0 %v101
    %792 = vmatpush1.msra.mxu0 %v100
    %793 = vmatprep.subr.mxu0 %v103
    %794 = vmatpush1.msra.mxu0 %v102
    %795 = vmatprep.subr.mxu0 %v105
    %796 = vmatpush1.msra.mxu0 %v104
    %797 = vmatprep.subr.mxu0 %v107
    %798 = vmatpush1.msra.mxu0 %v106
    %799 = vmatprep.subr.mxu0 %v109
    %800 = vmatpush1.msra.mxu0 %v108
    %801 = vmatprep.subr.mxu0 %v111
    %802 = vmatpush1.msra.mxu0 %v110
    %803 = vmatprep.subr.mxu0 %v113
    %804 = vmatpush1.msra.mxu0 %v112
    %805 = vmatprep.subr.mxu0 %v115
    %806 = vmatpush1.msra.mxu0 %v114
    %807 = vmatprep.subr.mxu0 %v117
    %808 = vmatpush1.msra.mxu0 %v116
    %809 = vmatprep.subr.mxu0 %v119
    %810 = vmatpush1.msra.mxu0 %v118
    %811 = vmatprep.subr.mxu0 %v121
    %812 = vmatpush1.msra.mxu0 %v120
    %813 = vmatprep.subr.mxu0 %v123
    %814 = vmatpush1.msra.mxu0 %v122
    %815 = vmatprep.subr.mxu0 %v125
    %816 = vmatpush1.msra.mxu0 %v124
    %817 = vmatprep.subr.mxu0 %v127
    %818 = vmatpush1.msra.mxu0 %v126
    %819 = vmatprep.mubr.f32.mxu0 %v679
    %820 = vmatmul.mubr.f32.gmra.mrb[0].mxu0 %v678
    %v821 = vpop.f32.mrb[0].mxu0
    %v822 = vadd.f32 %v751, %v821
    %v823 = vpop.f32.mrb[0].mxu0
    %v824 = vadd.f32 %v753, %v823
    %825 = vdwg.mxu0
    %s826 = scalar_lea.vmem [#allocation4], 48
    %v827 = vld [vmem:[%s826] sm:$0xff]
    %v828 = vld [vmem:[%s826 + $0x8] sm:$0xff]
    %v829 = vadd.f32 %v822, %v827
    %v830 = vadd.f32 %v824, %v828
    %v831 = vmul.f32 %v678, 0.8026
    %v832 = vmul.f32 %v679, 0.8026
    %v833 = vmul.f32 %v682, 0.1134
    %v834 = vmul.f32 %v683, 0.1134
    %v835 = vsub.f32 %v831, %v833
    %v836 = vsub.f32 %v832, %v834
    %v837 = vtanh.pop %v829
    %v838 = vtanh.pop %v830
    %v839 = vmul.f32 %v837, 0.042
    %v840 = vmul.f32 %v838, 0.042
    %v841 = vadd.f32 %v835, %v839
    %v842 = vadd.f32 %v836, %v840
    %v843 = vmul.f32 %v841, 0.042
    %v844 = vmul.f32 %v842, 0.042
    %v845 = vadd.f32 %v682, %v843
    %v846 = vadd.f32 %v683, %v844
    %847 = vmatprep.subr.mxu0 %v129
    %848 = vmatpush1.msra.mxu0 %v128
    %849 = vmatprep.subr.mxu0 %v131
    %850 = vmatpush1.msra.mxu0 %v130
    %851 = vmatprep.subr.mxu0 %v133
    %852 = vmatpush1.msra.mxu0 %v132
    %853 = vmatprep.subr.mxu0 %v135
    %854 = vmatpush1.msra.mxu0 %v134
    %855 = vmatprep.subr.mxu0 %v137
    %856 = vmatpush1.msra.mxu0 %v136
    %857 = vmatprep.subr.mxu0 %v139
    %858 = vmatpush1.msra.mxu0 %v138
    %859 = vmatprep.subr.mxu0 %v141
    %860 = vmatpush1.msra.mxu0 %v140
    %861 = vmatprep.subr.mxu0 %v143
    %862 = vmatpush1.msra.mxu0 %v142
    %863 = vmatprep.subr.mxu0 %v145
    %864 = vmatpush1.msra.mxu0 %v144
    %865 = vmatprep.subr.mxu0 %v147
    %866 = vmatpush1.msra.mxu0 %v146
    %867 = vmatprep.subr.mxu0 %v149
    %868 = vmatpush1.msra.mxu0 %v148
    %869 = vmatprep.subr.mxu0 %v151
    %870 = vmatpush1.msra.mxu0 %v150
    %871 = vmatprep.subr.mxu0 %v153
    %872 = vmatpush1.msra.mxu0 %v152
    %873 = vmatprep.subr.mxu0 %v155
    %874 = vmatpush1.msra.mxu0 %v154
    %875 = vmatprep.subr.mxu0 %v157
    %876 = vmatpush1.msra.mxu0 %v156
    %877 = vmatprep.subr.mxu0 %v159
    %878 = vmatpush1.msra.mxu0 %v158
    %879 = vmatprep.subr.mxu0 %v161
    %880 = vmatpush1.msra.mxu0 %v160
    %881 = vmatprep.subr.mxu0 %v163
    %882 = vmatpush1.msra.mxu0 %v162
    %883 = vmatprep.subr.mxu0 %v165
    %884 = vmatpush1.msra.mxu0 %v164
    %885 = vmatprep.subr.mxu0 %v167
    %886 = vmatpush1.msra.mxu0 %v166
    %887 = vmatprep.subr.mxu0 %v169
    %888 = vmatpush1.msra.mxu0 %v168
    %889 = vmatprep.subr.mxu0 %v171
    %890 = vmatpush1.msra.mxu0 %v170
    %891 = vmatprep.subr.mxu0 %v173
    %892 = vmatpush1.msra.mxu0 %v172
    %893 = vmatprep.subr.mxu0 %v175
    %894 = vmatpush1.msra.mxu0 %v174
    %895 = vmatprep.subr.mxu0 %v177
    %896 = vmatpush1.msra.mxu0 %v176
    %897 = vmatprep.subr.mxu0 %v179
    %898 = vmatpush1.msra.mxu0 %v178
    %899 = vmatprep.subr.mxu0 %v181
    %900 = vmatpush1.msra.mxu0 %v180
    %901 = vmatprep.subr.mxu0 %v183
    %902 = vmatpush1.msra.mxu0 %v182
    %903 = vmatprep.subr.mxu0 %v185
    %904 = vmatpush1.msra.mxu0 %v184
    %905 = vmatprep.subr.mxu0 %v187
    %906 = vmatpush1.msra.mxu0 %v186
    %907 = vmatprep.subr.mxu0 %v189
    %908 = vmatpush1.msra.mxu0 %v188
    %909 = vmatprep.subr.mxu0 %v191
    %910 = vmatpush1.msra.mxu0 %v190
    %911 = vmatprep.mubr.f32.mxu0 %v846
    %912 = vmatmul.mubr.f32.gmra.mrb[0].mxu0 %v845
    %v913 = vpop.f32.mrb[0].mxu0
    %v914 = vadd.f32 0.0, %v913
    %v915 = vpop.f32.mrb[0].mxu0
    %v916 = vadd.f32 0.0, %v915
    %917 = vdwg.mxu0
    %918 = vmatprep.subr.mxu0 %v65
    %919 = vmatpush1.msra.mxu0 %v64
    %920 = vmatprep.subr.mxu0 %v67
    %921 = vmatpush1.msra.mxu0 %v66
    %922 = vmatprep.subr.mxu0 %v69
    %923 = vmatpush1.msra.mxu0 %v68
    %924 = vmatprep.subr.mxu0 %v71
    %925 = vmatpush1.msra.mxu0 %v70
    %926 = vmatprep.subr.mxu0 %v73
    %927 = vmatpush1.msra.mxu0 %v72
    %928 = vmatprep.subr.mxu0 %v75
    %929 = vmatpush1.msra.mxu0 %v74
    %930 = vmatprep.subr.mxu0 %v77
    %931 = vmatpush1.msra.mxu0 %v76
    %932 = vmatprep.subr.mxu0 %v79
    %933 = vmatpush1.msra.mxu0 %v78
    %934 = vmatprep.subr.mxu0 %v81
    %935 = vmatpush1.msra.mxu0 %v80
    %936 = vmatprep.subr.mxu0 %v83
    %937 = vmatpush1.msra.mxu0 %v82
    %938 = vmatprep.subr.mxu0 %v85
    %939 = vmatpush1.msra.mxu0 %v84
    %940 = vmatprep.subr.mxu0 %v87
    %941 = vmatpush1.msra.mxu0 %v86
    %942 = vmatprep.subr.mxu0 %v89
    %943 = vmatpush1.msra.mxu0 %v88
    %944 = vmatprep.subr.mxu0 %v91
    %945 = vmatpush1.msra.mxu0 %v90
    %946 = vmatprep.subr.mxu0 %v93
    %947 = vmatpush1.msra.mxu0 %v92
    %948 = vmatprep.subr.mxu0 %v95
    %949 = vmatpush1.msra.mxu0 %v94
    %950 = vmatprep.subr.mxu0 %v97
    %951 = vmatpush1.msra.mxu0 %v96
    %952 = vmatprep.subr.mxu0 %v99
    %953 = vmatpush1.msra.mxu0 %v98
    %954 = vmatprep.subr.mxu0 %v101
    %955 = vmatpush1.msra.mxu0 %v100
    %956 = vmatprep.subr.mxu0 %v103
    %957 = vmatpush1.msra.mxu0 %v102
    %958 = vmatprep.subr.mxu0 %v105
    %959 = vmatpush1.msra.mxu0 %v104
    %960 = vmatprep.subr.mxu0 %v107
    %961 = vmatpush1.msra.mxu0 %v106
    %962 = vmatprep.subr.mxu0 %v109
    %963 = vmatpush1.msra.mxu0 %v108
    %964 = vmatprep.subr.mxu0 %v111
    %965 = vmatpush1.msra.mxu0 %v110
    %966 = vmatprep.subr.mxu0 %v113
    %967 = vmatpush1.msra.mxu0 %v112
    %968 = vmatprep.subr.mxu0 %v115
    %969 = vmatpush1.msra.mxu0 %v114
    %970 = vmatprep.subr.mxu0 %v117
    %971 = vmatpush1.msra.mxu0 %v116
    %972 = vmatprep.subr.mxu0 %v119
    %973 = vmatpush1.msra.mxu0 %v118
    %974 = vmatprep.subr.mxu0 %v121
    %975 = vmatpush1.msra.mxu0 %v120
    %976 = vmatprep.subr.mxu0 %v123
    %977 = vmatpush1.msra.mxu0 %v122
    %978 = vmatprep.subr.mxu0 %v125
    %979 = vmatpush1.msra.mxu0 %v124
    %980 = vmatprep.subr.mxu0 %v127
    %981 = vmatpush1.msra.mxu0 %v126
    %982 = vmatprep.mubr.f32.mxu0 %v842
    %983 = vmatmul.mubr.f32.gmra.mrb[0].mxu0 %v841
    %v984 = vpop.f32.mrb[0].mxu0
    %v985 = vadd.f32 %v914, %v984
    %v986 = vpop.f32.mrb[0].mxu0
    %v987 = vadd.f32 %v916, %v986
    %988 = vdwg.mxu0
    %s989 = scalar_lea.vmem [#allocation4], 64
    %v990 = vld [vmem:[%s989] sm:$0xff]
    %v991 = vld [vmem:[%s989 + $0x8] sm:$0xff]
    %v992 = vadd.f32 %v985, %v990
    %v993 = vadd.f32 %v987, %v991
    %v994 = vmul.f32 %v841, 0.8026
    %v995 = vmul.f32 %v842, 0.8026
    %v996 = vmul.f32 %v845, 0.1134
    %v997 = vmul.f32 %v846, 0.1134
    %v998 = vsub.f32 %v994, %v996
    %v999 = vsub.f32 %v995, %v997
    %v1000 = vtanh.pop %v992
    %v1001 = vtanh.pop %v993
    %v1002 = vmul.f32 %v1000, 0.042
    %v1003 = vmul.f32 %v1001, 0.042
    %v1004 = vadd.f32 %v998, %v1002
    %v1005 = vadd.f32 %v999, %v1003
    %v1006 = vmul.f32 %v1004, 0.042
    %v1007 = vmul.f32 %v1005, 0.042
    %v1008 = vadd.f32 %v845, %v1006
    %v1009 = vadd.f32 %v846, %v1007
    %1010 = vmatprep.subr.mxu0 %v129
    %1011 = vmatpush1.msra.mxu0 %v128
    %1012 = vmatprep.subr.mxu0 %v131
    %1013 = vmatpush1.msra.mxu0 %v130
    %1014 = vmatprep.subr.mxu0 %v133
    %1015 = vmatpush1.msra.mxu0 %v132
    %1016 = vmatprep.subr.mxu0 %v135
    %1017 = vmatpush1.msra.mxu0 %v134
    %1018 = vmatprep.subr.mxu0 %v137
    %1019 = vmatpush1.msra.mxu0 %v136
    %1020 = vmatprep.subr.mxu0 %v139
    %1021 = vmatpush1.msra.mxu0 %v138
    %1022 = vmatprep.subr.mxu0 %v141
    %1023 = vmatpush1.msra.mxu0 %v140
    %1024 = vmatprep.subr.mxu0 %v143
    %1025 = vmatpush1.msra.mxu0 %v142
    %1026 = vmatprep.subr.mxu0 %v145
    %1027 = vmatpush1.msra.mxu0 %v144
    %1028 = vmatprep.subr.mxu0 %v147
    %1029 = vmatpush1.msra.mxu0 %v146
    %1030 = vmatprep.subr.mxu0 %v149
    %1031 = vmatpush1.msra.mxu0 %v148
    %1032 = vmatprep.subr.mxu0 %v151
    %1033 = vmatpush1.msra.mxu0 %v150
    %1034 = vmatprep.subr.mxu0 %v153
    %1035 = vmatpush1.msra.mxu0 %v152
    %1036 = vmatprep.subr.mxu0 %v155
    %1037 = vmatpush1.msra.mxu0 %v154
    %1038 = vmatprep.subr.mxu0 %v157
    %1039 = vmatpush1.msra.mxu0 %v156
    %1040 = vmatprep.subr.mxu0 %v159
    %1041 = vmatpush1.msra.mxu0 %v158
    %1042 = vmatprep.subr.mxu0 %v161
    %1043 = vmatpush1.msra.mxu0 %v160
    %1044 = vmatprep.subr.mxu0 %v163
    %1045 = vmatpush1.msra.mxu0 %v162
    %1046 = vmatprep.subr.mxu0 %v165
    %1047 = vmatpush1.msra.mxu0 %v164
    %1048 = vmatprep.subr.mxu0 %v167
    %1049 = vmatpush1.msra.mxu0 %v166
    %1050 = vmatprep.subr.mxu0 %v169
    %1051 = vmatpush1.msra.mxu0 %v168
    %1052 = vmatprep.subr.mxu0 %v171
    %1053 = vmatpush1.msra.mxu0 %v170
    %1054 = vmatprep.subr.mxu0 %v173
    %1055 = vmatpush1.msra.mxu0 %v172
    %1056 = vmatprep.subr.mxu0 %v175
    %1057 = vmatpush1.msra.mxu0 %v174
    %1058 = vmatprep.subr.mxu0 %v177
    %1059 = vmatpush1.msra.mxu0 %v176
    %1060 = vmatprep.subr.mxu0 %v179
    %1061 = vmatpush1.msra.mxu0 %v178
    %1062 = vmatprep.subr.mxu0 %v181
    %1063 = vmatpush1.msra.mxu0 %v180
    %1064 = vmatprep.subr.mxu0 %v183
    %1065 = vmatpush1.msra.mxu0 %v182
    %1066 = vmatprep.subr.mxu0 %v185
    %1067 = vmatpush1.msra.mxu0 %v184
    %1068 = vmatprep.subr.mxu0 %v187
    %1069 = vmatpush1.msra.mxu0 %v186
    %1070 = vmatprep.subr.mxu0 %v189
    %1071 = vmatpush1.msra.mxu0 %v188
    %1072 = vmatprep.subr.mxu0 %v191
    %1073 = vmatpush1.msra.mxu0 %v190
    %1074 = vmatprep.mubr.f32.mxu0 %v1009
    %1075 = vmatmul.mubr.f32.gmra.mrb[0].mxu0 %v1008
    %v1076 = vpop.f32.mrb[0].mxu0
    %v1077 = vadd.f32 0.0, %v1076
    %v1078 = vpop.f32.mrb[0].mxu0
    %v1079 = vadd.f32 0.0, %v1078
    %1080 = vdwg.mxu0
    %1081 = vmatprep.subr.mxu0 %v65
    %1082 = vmatpush1.msra.mxu0 %v64
    %1083 = vmatprep.subr.mxu0 %v67
    %1084 = vmatpush1.msra.mxu0 %v66
    %1085 = vmatprep.subr.mxu0 %v69
    %1086 = vmatpush1.msra.mxu0 %v68
    %1087 = vmatprep.subr.mxu0 %v71
    %1088 = vmatpush1.msra.mxu0 %v70
    %1089 = vmatprep.subr.mxu0 %v73
    %1090 = vmatpush1.msra.mxu0 %v72
    %1091 = vmatprep.subr.mxu0 %v75
    %1092 = vmatpush1.msra.mxu0 %v74
    %1093 = vmatprep.subr.mxu0 %v77
    %1094 = vmatpush1.msra.mxu0 %v76
    %1095 = vmatprep.subr.mxu0 %v79
    %1096 = vmatpush1.msra.mxu0 %v78
    %1097 = vmatprep.subr.mxu0 %v81
    %1098 = vmatpush1.msra.mxu0 %v80
    %1099 = vmatprep.subr.mxu0 %v83
    %1100 = vmatpush1.msra.mxu0 %v82
    %1101 = vmatprep.subr.mxu0 %v85
    %1102 = vmatpush1.msra.mxu0 %v84
    %1103 = vmatprep.subr.mxu0 %v87
    %1104 = vmatpush1.msra.mxu0 %v86
    %1105 = vmatprep.subr.mxu0 %v89
    %1106 = vmatpush1.msra.mxu0 %v88
    %1107 = vmatprep.subr.mxu0 %v91
    %1108 = vmatpush1.msra.mxu0 %v90
    %1109 = vmatprep.subr.mxu0 %v93
    %1110 = vmatpush1.msra.mxu0 %v92
    %1111 = vmatprep.subr.mxu0 %v95
    %1112 = vmatpush1.msra.mxu0 %v94
    %1113 = vmatprep.subr.mxu0 %v97
    %1114 = vmatpush1.msra.mxu0 %v96
    %1115 = vmatprep.subr.mxu0 %v99
    %1116 = vmatpush1.msra.mxu0 %v98
    %1117 = vmatprep.subr.mxu0 %v101
    %1118 = vmatpush1.msra.mxu0 %v100
    %1119 = vmatprep.subr.mxu0 %v103
    %1120 = vmatpush1.msra.mxu0 %v102
    %1121 = vmatprep.subr.mxu0 %v105
    %1122 = vmatpush1.msra.mxu0 %v104
    %1123 = vmatprep.subr.mxu0 %v107
    %1124 = vmatpush1.msra.mxu0 %v106
    %1125 = vmatprep.subr.mxu0 %v109
    %1126 = vmatpush1.msra.mxu0 %v108
    %1127 = vmatprep.subr.mxu0 %v111
    %1128 = vmatpush1.msra.mxu0 %v110
    %1129 = vmatprep.subr.mxu0 %v113
    %1130 = vmatpush1.msra.mxu0 %v112
    %1131 = vmatprep.subr.mxu0 %v115
    %1132 = vmatpush1.msra.mxu0 %v114
    %1133 = vmatprep.subr.mxu0 %v117
    %1134 = vmatpush1.msra.mxu0 %v116
    %1135 = vmatprep.subr.mxu0 %v119
    %1136 = vmatpush1.msra.mxu0 %v118
    %1137 = vmatprep.subr.mxu0 %v121
    %1138 = vmatpush1.msra.mxu0 %v120
    %1139 = vmatprep.subr.mxu0 %v123
    %1140 = vmatpush1.msra.mxu0 %v122
    %1141 = vmatprep.subr.mxu0 %v125
    %1142 = vmatpush1.msra.mxu0 %v124
    %1143 = vmatprep.subr.mxu0 %v127
    %1144 = vmatpush1.msra.mxu0 %v126
    %1145 = vmatprep.mubr.f32.mxu0 %v1005
    %1146 = vmatmul.mubr.f32.gmra.mrb[0].mxu0 %v1004
    %v1147 = vpop.f32.mrb[0].mxu0
    %v1148 = vadd.f32 %v1077, %v1147
    %v1149 = vpop.f32.mrb[0].mxu0
    %v1150 = vadd.f32 %v1079, %v1149
    %1151 = vdwg.mxu0
    %s1152 = scalar_lea.vmem [#allocation4], 80
    %v1153 = vld [vmem:[%s1152] sm:$0xff]
    %v1154 = vld [vmem:[%s1152 + $0x8] sm:$0xff]
    %v1155 = vadd.f32 %v1148, %v1153
    %v1156 = vadd.f32 %v1150, %v1154
    %v1157 = vmul.f32 %v1004, 0.8026
    %v1158 = vmul.f32 %v1005, 0.8026
    %v1159 = vmul.f32 %v1008, 0.1134
    %v1160 = vmul.f32 %v1009, 0.1134
    %v1161 = vsub.f32 %v1157, %v1159
    %v1162 = vsub.f32 %v1158, %v1160
    %v1163 = vtanh.pop %v1155
    %v1164 = vtanh.pop %v1156
    %v1165 = vmul.f32 %v1163, 0.042
    %v1166 = vmul.f32 %v1164, 0.042
    %v1167 = vadd.f32 %v1161, %v1165
    %v1168 = vadd.f32 %v1162, %v1166
    %v1169 = vmul.f32 %v1167, 0.042
    %v1170 = vmul.f32 %v1168, 0.042
    %v1171 = vadd.f32 %v1008, %v1169
    %v1172 = vadd.f32 %v1009, %v1170
    %1173 = vmatprep.subr.mxu0 %v129
    %1174 = vmatpush1.msra.mxu0 %v128
    %1175 = vmatprep.subr.mxu0 %v131
    %1176 = vmatpush1.msra.mxu0 %v130
    %1177 = vmatprep.subr.mxu0 %v133
    %1178 = vmatpush1.msra.mxu0 %v132
    %1179 = vmatprep.subr.mxu0 %v135
    %1180 = vmatpush1.msra.mxu0 %v134
    %1181 = vmatprep.subr.mxu0 %v137
    %1182 = vmatpush1.msra.mxu0 %v136
    %1183 = vmatprep.subr.mxu0 %v139
    %1184 = vmatpush1.msra.mxu0 %v138
    %1185 = vmatprep.subr.mxu0 %v141
    %1186 = vmatpush1.msra.mxu0 %v140
    %1187 = vmatprep.subr.mxu0 %v143
    %1188 = vmatpush1.msra.mxu0 %v142
    %1189 = vmatprep.subr.mxu0 %v145
    %1190 = vmatpush1.msra.mxu0 %v144
    %1191 = vmatprep.subr.mxu0 %v147
    %1192 = vmatpush1.msra.mxu0 %v146
    %1193 = vmatprep.subr.mxu0 %v149
    %1194 = vmatpush1.msra.mxu0 %v148
    %1195 = vmatprep.subr.mxu0 %v151
    %1196 = vmatpush1.msra.mxu0 %v150
    %1197 = vmatprep.subr.mxu0 %v153
    %1198 = vmatpush1.msra.mxu0 %v152
    %1199 = vmatprep.subr.mxu0 %v155
    %1200 = vmatpush1.msra.mxu0 %v154
    %1201 = vmatprep.subr.mxu0 %v157
    %1202 = vmatpush1.msra.mxu0 %v156
    %1203 = vmatprep.subr.mxu0 %v159
    %1204 = vmatpush1.msra.mxu0 %v158
    %1205 = vmatprep.subr.mxu0 %v161
    %1206 = vmatpush1.msra.mxu0 %v160
    %1207 = vmatprep.subr.mxu0 %v163
    %1208 = vmatpush1.msra.mxu0 %v162
    %1209 = vmatprep.subr.mxu0 %v165
    %1210 = vmatpush1.msra.mxu0 %v164
    %1211 = vmatprep.subr.mxu0 %v167
    %1212 = vmatpush1.msra.mxu0 %v166
    %1213 = vmatprep.subr.mxu0 %v169
    %1214 = vmatpush1.msra.mxu0 %v168
    %1215 = vmatprep.subr.mxu0 %v171
    %1216 = vmatpush1.msra.mxu0 %v170
    %1217 = vmatprep.subr.mxu0 %v173
    %1218 = vmatpush1.msra.mxu0 %v172
    %1219 = vmatprep.subr.mxu0 %v175
    %1220 = vmatpush1.msra.mxu0 %v174
    %1221 = vmatprep.subr.mxu0 %v177
    %1222 = vmatpush1.msra.mxu0 %v176
    %1223 = vmatprep.subr.mxu0 %v179
    %1224 = vmatpush1.msra.mxu0 %v178
    %1225 = vmatprep.subr.mxu0 %v181
    %1226 = vmatpush1.msra.mxu0 %v180
    %1227 = vmatprep.subr.mxu0 %v183
    %1228 = vmatpush1.msra.mxu0 %v182
    %1229 = vmatprep.subr.mxu0 %v185
    %1230 = vmatpush1.msra.mxu0 %v184
    %1231 = vmatprep.subr.mxu0 %v187
    %1232 = vmatpush1.msra.mxu0 %v186
    %1233 = vmatprep.subr.mxu0 %v189
    %1234 = vmatpush1.msra.mxu0 %v188
    %1235 = vmatprep.subr.mxu0 %v191
    %1236 = vmatpush1.msra.mxu0 %v190
    %1237 = vmatprep.mubr.f32.mxu0 %v1172
    %1238 = vmatmul.mubr.f32.gmra.mrb[0].mxu0 %v1171
    %v1239 = vpop.f32.mrb[0].mxu0
    %v1240 = vadd.f32 0.0, %v1239
    %v1241 = vpop.f32.mrb[0].mxu0
    %v1242 = vadd.f32 0.0, %v1241
    %1243 = vdwg.mxu0
    %1244 = vmatprep.subr.mxu0 %v65
    %1245 = vmatpush1.msra.mxu0 %v64
    %1246 = vmatprep.subr.mxu0 %v67
    %1247 = vmatpush1.msra.mxu0 %v66
    %1248 = vmatprep.subr.mxu0 %v69
    %1249 = vmatpush1.msra.mxu0 %v68
    %1250 = vmatprep.subr.mxu0 %v71
    %1251 = vmatpush1.msra.mxu0 %v70
    %1252 = vmatprep.subr.mxu0 %v73
    %1253 = vmatpush1.msra.mxu0 %v72
    %1254 = vmatprep.subr.mxu0 %v75
    %1255 = vmatpush1.msra.mxu0 %v74
    %1256 = vmatprep.subr.mxu0 %v77
    %1257 = vmatpush1.msra.mxu0 %v76
    %1258 = vmatprep.subr.mxu0 %v79
    %1259 = vmatpush1.msra.mxu0 %v78
    %1260 = vmatprep.subr.mxu0 %v81
    %1261 = vmatpush1.msra.mxu0 %v80
    %1262 = vmatprep.subr.mxu0 %v83
    %1263 = vmatpush1.msra.mxu0 %v82
    %1264 = vmatprep.subr.mxu0 %v85
    %1265 = vmatpush1.msra.mxu0 %v84
    %1266 = vmatprep.subr.mxu0 %v87
    %1267 = vmatpush1.msra.mxu0 %v86
    %1268 = vmatprep.subr.mxu0 %v89
    %1269 = vmatpush1.msra.mxu0 %v88
    %1270 = vmatprep.subr.mxu0 %v91
    %1271 = vmatpush1.msra.mxu0 %v90
    %1272 = vmatprep.subr.mxu0 %v93
    %1273 = vmatpush1.msra.mxu0 %v92
    %1274 = vmatprep.subr.mxu0 %v95
    %1275 = vmatpush1.msra.mxu0 %v94
    %1276 = vmatprep.subr.mxu0 %v97
    %1277 = vmatpush1.msra.mxu0 %v96
    %1278 = vmatprep.subr.mxu0 %v99
    %1279 = vmatpush1.msra.mxu0 %v98
    %1280 = vmatprep.subr.mxu0 %v101
    %1281 = vmatpush1.msra.mxu0 %v100
    %1282 = vmatprep.subr.mxu0 %v103
    %1283 = vmatpush1.msra.mxu0 %v102
    %1284 = vmatprep.subr.mxu0 %v105
    %1285 = vmatpush1.msra.mxu0 %v104
    %1286 = vmatprep.subr.mxu0 %v107
    %1287 = vmatpush1.msra.mxu0 %v106
    %1288 = vmatprep.subr.mxu0 %v109
    %1289 = vmatpush1.msra.mxu0 %v108
    %1290 = vmatprep.subr.mxu0 %v111
    %1291 = vmatpush1.msra.mxu0 %v110
    %1292 = vmatprep.subr.mxu0 %v113
    %1293 = vmatpush1.msra.mxu0 %v112
    %1294 = vmatprep.subr.mxu0 %v115
    %1295 = vmatpush1.msra.mxu0 %v114
    %1296 = vmatprep.subr.mxu0 %v117
    %1297 = vmatpush1.msra.mxu0 %v116
    %1298 = vmatprep.subr.mxu0 %v119
    %1299 = vmatpush1.msra.mxu0 %v118
    %1300 = vmatprep.subr.mxu0 %v121
    %1301 = vmatpush1.msra.mxu0 %v120
    %1302 = vmatprep.subr.mxu0 %v123
    %1303 = vmatpush1.msra.mxu0 %v122
    %1304 = vmatprep.subr.mxu0 %v125
    %1305 = vmatpush1.msra.mxu0 %v124
    %1306 = vmatprep.subr.mxu0 %v127
    %1307 = vmatpush1.msra.mxu0 %v126
    %1308 = vmatprep.mubr.f32.mxu0 %v1168
    %1309 = vmatmul.mubr.f32.gmra.mrb[0].mxu0 %v1167
    %v1310 = vpop.f32.mrb[0].mxu0
    %v1311 = vadd.f32 %v1240, %v1310
    %v1312 = vpop.f32.mrb[0].mxu0
    %v1313 = vadd.f32 %v1242, %v1312
    %1314 = vdwg.mxu0
    %s1315 = scalar_lea.vmem [#allocation4], 96
    %v1316 = vld [vmem:[%s1315] sm:$0xff]
    %v1317 = vld [vmem:[%s1315 + $0x8] sm:$0xff]
    %v1318 = vadd.f32 %v1311, %v1316
    %v1319 = vadd.f32 %v1313, %v1317
    %v1320 = vmul.f32 %v1167, 0.8026
    %v1321 = vmul.f32 %v1168, 0.8026
    %v1322 = vmul.f32 %v1171, 0.1134
    %v1323 = vmul.f32 %v1172, 0.1134
    %v1324 = vsub.f32 %v1320, %v1322
    %v1325 = vsub.f32 %v1321, %v1323
    %v1326 = vtanh.pop %v1318
    %v1327 = vtanh.pop %v1319
    %v1328 = vmul.f32 %v1326, 0.042
    %v1329 = vmul.f32 %v1327, 0.042
    %v1330 = vadd.f32 %v1324, %v1328
    %v1331 = vadd.f32 %v1325, %v1329
    %v1332 = vmul.f32 %v1330, 0.042
    %v1333 = vmul.f32 %v1331, 0.042
    %v1334 = vadd.f32 %v1171, %v1332
    %v1335 = vadd.f32 %v1172, %v1333
    %1336 = vmatprep.subr.mxu0 %v129
    %1337 = vmatpush1.msra.mxu0 %v128
    %1338 = vmatprep.subr.mxu0 %v131
    %1339 = vmatpush1.msra.mxu0 %v130
    %1340 = vmatprep.subr.mxu0 %v133
    %1341 = vmatpush1.msra.mxu0 %v132
    %1342 = vmatprep.subr.mxu0 %v135
    %1343 = vmatpush1.msra.mxu0 %v134
    %1344 = vmatprep.subr.mxu0 %v137
    %1345 = vmatpush1.msra.mxu0 %v136
    %1346 = vmatprep.subr.mxu0 %v139
    %1347 = vmatpush1.msra.mxu0 %v138
    %1348 = vmatprep.subr.mxu0 %v141
    %1349 = vmatpush1.msra.mxu0 %v140
    %1350 = vmatprep.subr.mxu0 %v143
    %1351 = vmatpush1.msra.mxu0 %v142
    %1352 = vmatprep.subr.mxu0 %v145
    %1353 = vmatpush1.msra.mxu0 %v144
    %1354 = vmatprep.subr.mxu0 %v147
    %1355 = vmatpush1.msra.mxu0 %v146
    %1356 = vmatprep.subr.mxu0 %v149
    %1357 = vmatpush1.msra.mxu0 %v148
    %1358 = vmatprep.subr.mxu0 %v151
    %1359 = vmatpush1.msra.mxu0 %v150
    %1360 = vmatprep.subr.mxu0 %v153
    %1361 = vmatpush1.msra.mxu0 %v152
    %1362 = vmatprep.subr.mxu0 %v155
    %1363 = vmatpush1.msra.mxu0 %v154
    %1364 = vmatprep.subr.mxu0 %v157
    %1365 = vmatpush1.msra.mxu0 %v156
    %1366 = vmatprep.subr.mxu0 %v159
    %1367 = vmatpush1.msra.mxu0 %v158
    %1368 = vmatprep.subr.mxu0 %v161
    %1369 = vmatpush1.msra.mxu0 %v160
    %1370 = vmatprep.subr.mxu0 %v163
    %1371 = vmatpush1.msra.mxu0 %v162
    %1372 = vmatprep.subr.mxu0 %v165
    %1373 = vmatpush1.msra.mxu0 %v164
    %1374 = vmatprep.subr.mxu0 %v167
    %1375 = vmatpush1.msra.mxu0 %v166
    %1376 = vmatprep.subr.mxu0 %v169
    %1377 = vmatpush1.msra.mxu0 %v168
    %1378 = vmatprep.subr.mxu0 %v171
    %1379 = vmatpush1.msra.mxu0 %v170
    %1380 = vmatprep.subr.mxu0 %v173
    %1381 = vmatpush1.msra.mxu0 %v172
    %1382 = vmatprep.subr.mxu0 %v175
    %1383 = vmatpush1.msra.mxu0 %v174
    %1384 = vmatprep.subr.mxu0 %v177
    %1385 = vmatpush1.msra.mxu0 %v176
    %1386 = vmatprep.subr.mxu0 %v179
    %1387 = vmatpush1.msra.mxu0 %v178
    %1388 = vmatprep.subr.mxu0 %v181
    %1389 = vmatpush1.msra.mxu0 %v180
    %1390 = vmatprep.subr.mxu0 %v183
    %1391 = vmatpush1.msra.mxu0 %v182
    %1392 = vmatprep.subr.mxu0 %v185
    %1393 = vmatpush1.msra.mxu0 %v184
    %1394 = vmatprep.subr.mxu0 %v187
    %1395 = vmatpush1.msra.mxu0 %v186
    %1396 = vmatprep.subr.mxu0 %v189
    %1397 = vmatpush1.msra.mxu0 %v188
    %1398 = vmatprep.subr.mxu0 %v191
    %1399 = vmatpush1.msra.mxu0 %v190
    %1400 = vmatprep.mubr.f32.mxu0 %v1335
    %1401 = vmatmul.mubr.f32.gmra.mrb[0].mxu0 %v1334
    %v1402 = vpop.f32.mrb[0].mxu0
    %v1403 = vadd.f32 0.0, %v1402
    %v1404 = vpop.f32.mrb[0].mxu0
    %v1405 = vadd.f32 0.0, %v1404
    %1406 = vdwg.mxu0
    %1407 = vmatprep.subr.mxu0 %v65
    %1408 = vmatpush1.msra.mxu0 %v64
    %1409 = vmatprep.subr.mxu0 %v67
    %1410 = vmatpush1.msra.mxu0 %v66
    %1411 = vmatprep.subr.mxu0 %v69
    %1412 = vmatpush1.msra.mxu0 %v68
    %1413 = vmatprep.subr.mxu0 %v71
    %1414 = vmatpush1.msra.mxu0 %v70
    %1415 = vmatprep.subr.mxu0 %v73
    %1416 = vmatpush1.msra.mxu0 %v72
    %1417 = vmatprep.subr.mxu0 %v75
    %1418 = vmatpush1.msra.mxu0 %v74
    %1419 = vmatprep.subr.mxu0 %v77
    %1420 = vmatpush1.msra.mxu0 %v76
    %1421 = vmatprep.subr.mxu0 %v79
    %1422 = vmatpush1.msra.mxu0 %v78
    %1423 = vmatprep.subr.mxu0 %v81
    %1424 = vmatpush1.msra.mxu0 %v80
    %1425 = vmatprep.subr.mxu0 %v83
    %1426 = vmatpush1.msra.mxu0 %v82
    %1427 = vmatprep.subr.mxu0 %v85
    %1428 = vmatpush1.msra.mxu0 %v84
    %1429 = vmatprep.subr.mxu0 %v87
    %1430 = vmatpush1.msra.mxu0 %v86
    %1431 = vmatprep.subr.mxu0 %v89
    %1432 = vmatpush1.msra.mxu0 %v88
    %1433 = vmatprep.subr.mxu0 %v91
    %1434 = vmatpush1.msra.mxu0 %v90
    %1435 = vmatprep.subr.mxu0 %v93
    %1436 = vmatpush1.msra.mxu0 %v92
    %1437 = vmatprep.subr.mxu0 %v95
    %1438 = vmatpush1.msra.mxu0 %v94
    %1439 = vmatprep.subr.mxu0 %v97
    %1440 = vmatpush1.msra.mxu0 %v96
    %1441 = vmatprep.subr.mxu0 %v99
    %1442 = vmatpush1.msra.mxu0 %v98
    %1443 = vmatprep.subr.mxu0 %v101
    %1444 = vmatpush1.msra.mxu0 %v100
    %1445 = vmatprep.subr.mxu0 %v103
    %1446 = vmatpush1.msra.mxu0 %v102
    %1447 = vmatprep.subr.mxu0 %v105
    %1448 = vmatpush1.msra.mxu0 %v104
    %1449 = vmatprep.subr.mxu0 %v107
    %1450 = vmatpush1.msra.mxu0 %v106
    %1451 = vmatprep.subr.mxu0 %v109
    %1452 = vmatpush1.msra.mxu0 %v108
    %1453 = vmatprep.subr.mxu0 %v111
    %1454 = vmatpush1.msra.mxu0 %v110
    %1455 = vmatprep.subr.mxu0 %v113
    %1456 = vmatpush1.msra.mxu0 %v112
    %1457 = vmatprep.subr.mxu0 %v115
    %1458 = vmatpush1.msra.mxu0 %v114
    %1459 = vmatprep.subr.mxu0 %v117
    %1460 = vmatpush1.msra.mxu0 %v116
    %1461 = vmatprep.subr.mxu0 %v119
    %1462 = vmatpush1.msra.mxu0 %v118
    %1463 = vmatprep.subr.mxu0 %v121
    %1464 = vmatpush1.msra.mxu0 %v120
    %1465 = vmatprep.subr.mxu0 %v123
    %1466 = vmatpush1.msra.mxu0 %v122
    %1467 = vmatprep.subr.mxu0 %v125
    %1468 = vmatpush1.msra.mxu0 %v124
    %1469 = vmatprep.subr.mxu0 %v127
    %1470 = vmatpush1.msra.mxu0 %v126
    %1471 = vmatprep.mubr.f32.mxu0 %v1331
    %1472 = vmatmul.mubr.f32.gmra.mrb[0].mxu0 %v1330
    %v1473 = vpop.f32.mrb[0].mxu0
    %v1474 = vadd.f32 %v1403, %v1473
    %v1475 = vpop.f32.mrb[0].mxu0
    %v1476 = vadd.f32 %v1405, %v1475
    %1477 = vdwg.mxu0
    %s1478 = scalar_lea.vmem [#allocation4], 112
    %v1479 = vld [vmem:[%s1478] sm:$0xff]
    %v1480 = vld [vmem:[%s1478 + $0x8] sm:$0xff]
    %v1481 = vadd.f32 %v1474, %v1479
    %v1482 = vadd.f32 %v1476, %v1480
    %v1483 = vmul.f32 %v1330, 0.8026
    %v1484 = vmul.f32 %v1331, 0.8026
    %v1485 = vmul.f32 %v1334, 0.1134
    %v1486 = vmul.f32 %v1335, 0.1134
    %v1487 = vsub.f32 %v1483, %v1485
    %v1488 = vsub.f32 %v1484, %v1486
    %v1489 = vtanh.pop %v1481
    %v1490 = vtanh.pop %v1482
    %v1491 = vmul.f32 %v1489, 0.042
    %v1492 = vmul.f32 %v1490, 0.042
    %v1493 = vadd.f32 %v1487, %v1491
    %v1494 = vadd.f32 %v1488, %v1492
    %v1495 = vmul.f32 %v1493, 0.042
    %v1496 = vmul.f32 %v1494, 0.042
    %v1497 = vadd.f32 %v1334, %v1495
    %v1498 = vadd.f32 %v1335, %v1496
    %1499 = vst [vmem:[#allocation2] sm:$0xff] %v1493
    %1500 = vst [vmem:[#allocation2 + $0x8] sm:$0xff] %v1494
    %1501 = vst [vmem:[#allocation3] sm:$0xff] %v1497
    %1502 = vst [vmem:[#allocation3 + $0x8] sm:$0xff] %v1498
    // Predicated region
    $region30: #{tpu_custom_call.1} parent=1 // pred_check
      %p1503 = pneg %p56
    $region31: #{tpu_custom_call.1} parent=1 // pred_check_branch
      %1505 = sbr.rel (%p1503) target = $region33
    $region32: #{tpu_custom_call.1} parent=1 // pred_region
      %1506 = vst [vmem:[#allocation10] sm:$0xff] %v1497
      %1507 = vst [vmem:[#allocation10 + $0x8] sm:$0xff] %v1498
    $region33: #{tpu_custom_call.1} parent=1 // pred_fallthru
      _
    // Predicated region
    $region34: #{tpu_custom_call.1} parent=1 // pred_check
      _
    $region35: #{tpu_custom_call.1} parent=1 // pred_check_branch
      %1509 = sbr.rel (0) target = $region37
    $region36: #{tpu_custom_call.1} parent=1 // pred_region
      %s1511 = ssub.s32 256, 256
      %1512 = vsyncadd [#allocation6], %s1511
      %s1514 = sshll.u32 [#allocation10], 4
      %s1515 = int_to_ptr.vmem [resolvable:$true] %s1514
      %1517 = dma.vmem_to_hbm [thread:$0]  %s1515, 256, %s3, [#allocation6]
    $region37: #{tpu_custom_call.1} parent=1 // pred_fallthru
      _
    // Predicated region
    $region38: #{tpu_custom_call.1} parent=1 // pred_check
      _
    $region39: #{tpu_custom_call.1} parent=1 // pred_check_branch
      %1519 = sbr.rel (0) target = $region41
    $region40: #{tpu_custom_call.1} parent=1 // pred_region
      %1520 = dma.done [#allocation6], 256
    $region41: #{tpu_custom_call.1} parent=1 // pred_fallthru
      _
    %1521 = vsyncpa [#allocation5], 1
    %1522 = vsyncpa [#allocation8], 1
    %1523 = vsyncpa [#allocation6], 1

</llo_original>
